<compile_context>
chip_gen: v6e
topology: v6e:2x2x1
jax: 0.10.0
libtpu: 0.0.40
codegen_flags: <defaults>
</compile_context>

<pallas_src>
import functools

import jax
import jax.numpy as jnp
from jax import lax
from jax.experimental import pallas as pl
from jax.experimental.pallas import tpu as pltpu


def _conv_kernel(x_ref, wt_ref, pos_ref, o_ref, xp_ref, *, H, W, KH, KW, Ho, Wo, pad):
    # x_ref:   (1, H, W, C)      one batch element, channels-last
    # wt_ref:  (KH*KW*C, Cout)   x-part of the weights, rows ordered (kh, kw, c)
    # pos_ref: (Cout, Ho*Wo)     positional bias = conv(coords, W_coord) + bias
    # o_ref:   (1, Cout, Ho*Wo)  lane-dense output block (free-reshaped to NCHW outside)
    # xp_ref:  (Hp, Wp, C)       VMEM scratch: zero-padded copy of this batch element
    C = x_ref.shape[-1]

    # ---- in-VMEM zero padding (replaces the jnp.pad HBM round trip) ----
    if pad > 0:
        xp_ref[...] = jnp.zeros_like(xp_ref)
        xp_ref[pad:pad + H, pad:pad + W, :] = x_ref[0].astype(xp_ref.dtype)
    else:
        xp_ref[...] = x_ref[0].astype(xp_ref.dtype)

    # ---- im2col slab: all KH*KW taps fused into a single matmul ----
    # patch (Ho, Wo, C) -> (Ho*Wo, C): collapse of leading dims, lane dim (C) unchanged
    # and Wo a multiple of the 8-sublane tile, so this reshape moves no data.
    cols = []
    for kh in range(KH):
        for kw in range(KW):
            patch = xp_ref[kh:kh + Ho, kw:kw + Wo, :]       # (Ho, Wo, C)
            cols.append(patch.reshape(Ho * Wo, C))
    slab = jnp.concatenate(cols, axis=-1)                   # (Ho*Wo, KH*KW*C)

    # single MXU matmul, f32 accumulate
    acc = jnp.dot(slab, wt_ref[...], preferred_element_type=jnp.float32)  # (Ho*Wo, Cout)

    # positional bias folded into the result; tiny in-VMEM transpose gives the
    # channel-major, lane-dense (Cout, Ho*Wo) layout for an unmasked store.
    o_ref[0] = (pos_ref[...] + acc.T).astype(o_ref.dtype)


def cordconv2d(x_nchw, weight_hwio, bias, *, stride=1, padding=0, dilation=1,
               groups=1, with_r=False):
    """CoordConv2d forward.  x is NCHW; weight is HWIO (KH, KW, C+extra, Cout).
    (PyTorch's nn.Conv2d OIHW weight maps to this via transpose(2, 3, 1, 0).)"""
    assert stride == 1 and dilation == 1 and groups == 1, \
        "only stride=1, dilation=1, groups=1 are supported"
    B, C, H, W = x_nchw.shape
    KH, KW, cin_tot, Cout = weight_hwio.shape
    extra = 3 if with_r else 2
    assert cin_tot == C + extra, "weight input-channel dim must be C + coord channels"

    Hp, Wp = H + 2 * padding, W + 2 * padding
    Ho, Wo = Hp - KH + 1, Wp - KW + 1
    f32 = jnp.float32

    # ---- batch-invariant precompute (mirrors the module's `is_first` caching) ----
    # Coord channels in PyTorch order: _c_H (varies along H), _c_W (varies along W), [rr].
    hh = (jnp.arange(H, dtype=f32) / (H - 1)) * 2.0 - 1.0
    ww = (jnp.arange(W, dtype=f32) / (W - 1)) * 2.0 - 1.0
    cH = jnp.broadcast_to(hh[:, None], (H, W))
    cW = jnp.broadcast_to(ww[None, :], (H, W))
    coords = [cH, cW]
    if with_r:
        coords.append(jnp.sqrt((cH - 0.5) ** 2 + (cW - 0.5) ** 2))
    coord = jnp.pad(jnp.stack(coords, axis=0),                      # (extra, Hp, Wp)
                    ((0, 0), (padding, padding), (padding, padding)))

    # conv is linear in input channels -> fold conv(coords, W_coord) + bias into a
    # positional bias so the kernel never touches the coord channels.
    w_coord = weight_hwio[:, :, C:, :].astype(f32)                  # (KH, KW, extra, Cout)
    pos = jnp.broadcast_to(bias.astype(f32)[:, None, None], (Cout, Ho, Wo))
    for kh in range(KH):
        for kw in range(KW):
            pos = pos + jnp.einsum("eo,ehw->ohw", w_coord[kh, kw],
                                   coord[:, kh:kh + Ho, kw:kw + Wo])
    pos = pos.reshape(Cout, Ho * Wo)

    # x-part of the weights, flattened to (KH*KW*C, Cout) with (kh, kw, c) row order
    # (matches the slab column order built in the kernel).
    wt = weight_hwio[:, :, :C, :].astype(f32).reshape(KH * KW * C, Cout)

    # Channels-last input (small tensor; enables the tile-aligned in-kernel im2col).
    x_nhwc = jnp.transpose(x_nchw, (0, 2, 3, 1))                    # (B, H, W, C)

    out_flat = pl.pallas_call(
        functools.partial(_conv_kernel, H=H, W=W, KH=KH, KW=KW, Ho=Ho, Wo=Wo,
                          pad=padding),
        out_shape=jax.ShapeDtypeStruct((B, Cout, Ho * Wo), x_nchw.dtype),
        grid=(B,),
        in_specs=[
            pl.BlockSpec((1, H, W, C), lambda b: (b, 0, 0, 0)),
            pl.BlockSpec((KH * KW * C, Cout), lambda b: (0, 0)),
            pl.BlockSpec((Cout, Ho * Wo), lambda b: (0, 0)),
        ],
        out_specs=pl.BlockSpec((1, Cout, Ho * Wo), lambda b: (b, 0, 0)),
        scratch_shapes=[pltpu.VMEM((Hp, Wp, C), f32)],
        compiler_params=pltpu.CompilerParams(dimension_semantics=("parallel",)),
    )(x_nhwc, wt, pos)

    # (B, Cout, Ho*Wo) -> (B, Cout, Ho, Wo): contiguous split of the last dim -> free.
    return out_flat.reshape(B, Cout, Ho, Wo)


def _reference_cordconv(x_nchw, weight_hwio, bias, padding, with_r):
    """Pure-JAX reference mirroring the PyTorch module (NCHW)."""
    B, C, H, W = x_nchw.shape
    hh = (jnp.arange(H, dtype=x_nchw.dtype) / (H - 1)) * 2.0 - 1.0
    ww = (jnp.arange(W, dtype=x_nchw.dtype) / (W - 1)) * 2.0 - 1.0
    cH = jnp.broadcast_to(hh[None, None, :, None], (B, 1, H, W))
    cW = jnp.broadcast_to(ww[None, None, None, :], (B, 1, H, W))
    feats = [x_nchw, cH, cW]
    if with_r:
        feats.append(jnp.sqrt((cH - 0.5) ** 2 + (cW - 0.5) ** 2))
    xa = jnp.concatenate(feats, axis=1)
    w_oihw = jnp.transpose(weight_hwio, (3, 2, 0, 1))
    out = lax.conv_general_dilated(
        xa, w_oihw, window_strides=(1, 1),
        padding=[(padding, padding), (padding, padding)],
        dimension_numbers=("NCHW", "OIHW", "NCHW"),
    )
    return out + bias[None, :, None, None]


if __name__ == "__main__":
    key = jax.random.PRNGKey(0)
    B, C, H, W = 2, 4, 16, 16
    Cout, K, pad = 8, 3, 1

    for with_r in (False, True):
        extra = 3 if with_r else 2
        k1, k2, k3 = jax.random.split(jax.random.fold_in(key, int(with_r)), 3)
        x = jax.random.normal(k1, (B, C, H, W), dtype=jnp.float32)

        # Deterministic synthetic Conv2d params (PyTorch-style uniform fan-in bound).
        fan_in = (C + extra) * K * K
        bound = fan_in ** -0.5
        weight = jax.random.uniform(k2, (K, K, C + extra, Cout), jnp.float32,
                                    -bound, bound)
        bias = jax.random.uniform(k3, (Cout,), jnp.float32, -bound, bound)

        out = cordconv2d(x, weight, bias, padding=pad, with_r=with_r)
        out = jax.block_until_ready(out)

        ref = _reference_cordconv(x, weight, bias, pad, with_r)
        assert out.shape == (B, Cout, H, W), out.shape
        assert jnp.allclose(out, ref, atol=1e-4, rtol=1e-4), \
            f"mismatch vs reference (with_r={with_r})"

    print("KERNEL_OK")
</pallas_src>

<mosaic_0001>
module attributes {stable_mosaic.version = 11 : i64} {
  func.func @_conv_kernel(%arg0: i32, %arg1: memref<1x16x16x4xf32, #tpu.memory_space<vmem>>, %arg2: memref<36x8xf32, #tpu.memory_space<vmem>>, %arg3: memref<8x256xf32, #tpu.memory_space<vmem>>, %arg4: memref<1x8x256xf32, #tpu.memory_space<vmem>>, %arg5: memref<18x18x4xf32, #tpu.memory_space<vmem>>) attributes {dimension_semantics = [#tpu.dimension_semantics<parallel>], iteration_bounds = array<i64: 2>, scalar_prefetch = 0 : i64, scratch_operands = 1 : i64, tpu.core_type = #tpu.core_type<tc>, window_params = [{transform_indices = @transform_0, window_bounds = array<i64: 1, 16, 16, 4>}, {pipeline_mode = #tpu.pipeline_mode<synchronous>, transform_indices = @transform_1, window_bounds = array<i64: 36, 8>}, {pipeline_mode = #tpu.pipeline_mode<synchronous>, transform_indices = @transform_2, window_bounds = array<i64: 8, 256>}, {transform_indices = @transform_3, window_bounds = array<i64: 1, 8, 256>}]} {
    %cst = arith.constant 0.000000e+00 : f32
    %0 = vector.broadcast %cst : f32 to vector<18x18x4xf32>
    %c0 = arith.constant 0 : index
    %c0_0 = arith.constant 0 : index
    %c0_1 = arith.constant 0 : index
    %1 = vector.load %arg5[%c0, %c0_0, %c0_1] : memref<18x18x4xf32, #tpu.memory_space<vmem>>, vector<18x18x4xf32>
    tpu.vector_store %arg5[%c0, %c0_0, %c0_1], %0 {strides = array<i32>} : memref<18x18x4xf32, #tpu.memory_space<vmem>>, vector<18x18x4xf32>,
    %c0_2 = arith.constant 0 : index
    %c0_3 = arith.constant 0 : index
    %c0_4 = arith.constant 0 : index
    %c0_5 = arith.constant 0 : index
    %2 = vector.load %arg1[%c0_2, %c0_3, %c0_4, %c0_5] : memref<1x16x16x4xf32, #tpu.memory_space<vmem>>, vector<1x16x16x4xf32>
    %3 = vector.shape_cast %2 : vector<1x16x16x4xf32> to vector<16x16x4xf32>
    %c1 = arith.constant 1 : index
    %c1_6 = arith.constant 1 : index
    %c0_7 = arith.constant 0 : index
    %4 = vector.load %arg5[%c1, %c1_6, %c0_7] : memref<18x18x4xf32, #tpu.memory_space<vmem>>, vector<16x16x4xf32>
    tpu.vector_store %arg5[%c1, %c1_6, %c0_7], %3 {strides = array<i32>} : memref<18x18x4xf32, #tpu.memory_space<vmem>>, vector<16x16x4xf32>,
    %c0_8 = arith.constant 0 : index
    %c0_9 = arith.constant 0 : index
    %c0_10 = arith.constant 0 : index
    %5 = vector.load %arg5[%c0_8, %c0_9, %c0_10] : memref<18x18x4xf32, #tpu.memory_space<vmem>>, vector<16x16x4xf32>
    %6 = vector.shape_cast %5 : vector<16x16x4xf32> to vector<256x4xf32>
    %c0_11 = arith.constant 0 : index
    %c1_12 = arith.constant 1 : index
    %c0_13 = arith.constant 0 : index
    %7 = vector.load %arg5[%c0_11, %c1_12, %c0_13] : memref<18x18x4xf32, #tpu.memory_space<vmem>>, vector<16x16x4xf32>
    %8 = vector.shape_cast %7 : vector<16x16x4xf32> to vector<256x4xf32>
    %c0_14 = arith.constant 0 : index
    %c2 = arith.constant 2 : index
    %c0_15 = arith.constant 0 : index
    %9 = vector.load %arg5[%c0_14, %c2, %c0_15] : memref<18x18x4xf32, #tpu.memory_space<vmem>>, vector<16x16x4xf32>
    %10 = vector.shape_cast %9 : vector<16x16x4xf32> to vector<256x4xf32>
    %c1_16 = arith.constant 1 : index
    %c0_17 = arith.constant 0 : index
    %c0_18 = arith.constant 0 : index
    %11 = vector.load %arg5[%c1_16, %c0_17, %c0_18] : memref<18x18x4xf32, #tpu.memory_space<vmem>>, vector<16x16x4xf32>
    %12 = vector.shape_cast %11 : vector<16x16x4xf32> to vector<256x4xf32>
    %c1_19 = arith.constant 1 : index
    %c1_20 = arith.constant 1 : index
    %c0_21 = arith.constant 0 : index
    %13 = vector.load %arg5[%c1_19, %c1_20, %c0_21] : memref<18x18x4xf32, #tpu.memory_space<vmem>>, vector<16x16x4xf32>
    %14 = vector.shape_cast %13 : vector<16x16x4xf32> to vector<256x4xf32>
    %c1_22 = arith.constant 1 : index
    %c2_23 = arith.constant 2 : index
    %c0_24 = arith.constant 0 : index
    %15 = vector.load %arg5[%c1_22, %c2_23, %c0_24] : memref<18x18x4xf32, #tpu.memory_space<vmem>>, vector<16x16x4xf32>
    %16 = vector.shape_cast %15 : vector<16x16x4xf32> to vector<256x4xf32>
    %c2_25 = arith.constant 2 : index
    %c0_26 = arith.constant 0 : index
    %c0_27 = arith.constant 0 : index
    %17 = vector.load %arg5[%c2_25, %c0_26, %c0_27] : memref<18x18x4xf32, #tpu.memory_space<vmem>>, vector<16x16x4xf32>
    %18 = vector.shape_cast %17 : vector<16x16x4xf32> to vector<256x4xf32>
    %c2_28 = arith.constant 2 : index
    %c1_29 = arith.constant 1 : index
    %c0_30 = arith.constant 0 : index
    %19 = vector.load %arg5[%c2_28, %c1_29, %c0_30] : memref<18x18x4xf32, #tpu.memory_space<vmem>>, vector<16x16x4xf32>
    %20 = vector.shape_cast %19 : vector<16x16x4xf32> to vector<256x4xf32>
    %c2_31 = arith.constant 2 : index
    %c2_32 = arith.constant 2 : index
    %c0_33 = arith.constant 0 : index
    %21 = vector.load %arg5[%c2_31, %c2_32, %c0_33] : memref<18x18x4xf32, #tpu.memory_space<vmem>>, vector<16x16x4xf32>
    %22 = vector.shape_cast %21 : vector<16x16x4xf32> to vector<256x4xf32>
    %23 = tpu.concatenate %6, %8, %10, %12, %14, %16, %18, %20, %22 in 1 : vector<256x4xf32>, vector<256x4xf32>, vector<256x4xf32>, vector<256x4xf32>, vector<256x4xf32>, vector<256x4xf32>, vector<256x4xf32>, vector<256x4xf32>, vector<256x4xf32> -> vector<256x36xf32>
    %c0_34 = arith.constant 0 : index
    %c0_35 = arith.constant 0 : index
    %24 = vector.load %arg2[%c0_34, %c0_35] : memref<36x8xf32, #tpu.memory_space<vmem>>, vector<36x8xf32>
    %cst_36 = arith.constant dense<0.000000e+00> : vector<256x8xf32>
    %25 = tpu.matmul %23, %24, %cst_36 {dimension_numbers = #tpu.dot_dimension_numbers<[1], [0], [0], [1], [0, 0, 1, 1], [], []>} : vector<256x36xf32>, vector<36x8xf32>, vector<256x8xf32> -> vector<256x8xf32>
    %c0_37 = arith.constant 0 : index
    %c0_38 = arith.constant 0 : index
    %26 = vector.load %arg3[%c0_37, %c0_38] : memref<8x256xf32, #tpu.memory_space<vmem>>, vector<8x256xf32>
    %27 = tpu.transpose %25, [1, 0] : vector<256x8xf32> -> vector<8x256xf32>
    %28 = arith.addf %26, %27 : vector<8x256xf32>
    %c0_39 = arith.constant 0 : index
    %c0_40 = arith.constant 0 : index
    %c0_41 = arith.constant 0 : index
    %29 = vector.load %arg4[%c0_39, %c0_40, %c0_41] : memref<1x8x256xf32, #tpu.memory_space<vmem>>, vector<1x8x256xf32>
    %30 = vector.shape_cast %29 : vector<1x8x256xf32> to vector<8x256xf32>
    %31 = vector.shape_cast %28 : vector<8x256xf32> to vector<1x8x256xf32>
    tpu.vector_store %arg4[%c0_39, %c0_40, %c0_41], %31 {strides = array<i32>} : memref<1x8x256xf32, #tpu.memory_space<vmem>>, vector<1x8x256xf32>,
    return
  }
  func.func @transform_0(%arg0: i32) -> (i32, i32, i32, i32) {
    %c0_i32 = arith.constant 0 : i32
    %c0_i32_0 = arith.constant 0 : i32
    %c0_i32_1 = arith.constant 0 : i32
    %c0_i32_2 = arith.constant 0 : i32
    return %arg0, %c0_i32, %c0_i32_0, %c0_i32_1 : i32, i32, i32, i32
  }
  func.func @transform_1(%arg0: i32) -> (i32, i32) {
    %c0_i32 = arith.constant 0 : i32
    %c0_i32_0 = arith.constant 0 : i32
    %c0_i32_1 = arith.constant 0 : i32
    return %c0_i32, %c0_i32_0 : i32, i32
  }
  func.func @transform_2(%arg0: i32) -> (i32, i32) {
    %c0_i32 = arith.constant 0 : i32
    %c0_i32_0 = arith.constant 0 : i32
    %c0_i32_1 = arith.constant 0 : i32
    return %c0_i32, %c0_i32_0 : i32, i32
  }
  func.func @transform_3(%arg0: i32) -> (i32, i32, i32) {
    %c0_i32 = arith.constant 0 : i32
    %c0_i32_0 = arith.constant 0 : i32
    %c0_i32_1 = arith.constant 0 : i32
    return %arg0, %c0_i32, %c0_i32_0 : i32, i32, i32
  }
}

</mosaic_0001>

<llo_original>
// kernel: tpu_custom_call.1
$region0: #{tpu_custom_call.1}
  #allocation0 [shape = 'u32[]', space=smem, size = 0x4, offset = 0x4, fixed_abs, tag = 'smem constant byte address 0x4 - core index']
  #allocation1 [shape = 'u32[144,128]{1,0:T(1,128)}', space=vmem, size = 0x12000, scoped, tag = 'internal scratch']
  #allocation2 [shape = 'f32[18,18,4]{2,1,0:T(8,128)}', space=vmem, size = 0x36000, scoped, tag = 'scratch operand']
  %s0 = inlined_call_operand.vmem [shape: f32[2,16,16,4], index: 0, kind: input, shape index: {}]
  %s1 = inlined_call_operand.vmem [shape: f32[36,8], index: 1, kind: input, shape index: {}]
  %s2 = inlined_call_operand.vmem [shape: f32[8,256], index: 2, kind: input, shape index: {}]
  %s3 = inlined_call_operand.hbm [shape: f32[2,8,256], index: 3, kind: output, shape index: {}]
  %s4 = sld [smem:[#allocation0]]
  $region45: #{tpu_custom_call.1} parent=0
    _
  %s6 = ssub.s32 1, %s4
  %s7 = scalar_select 0, %s6, %s4
  $region1: #{tpu_custom_call.1} parent=0
    #allocation3 [shape = 'u8[16384]{0}', space=vmem, size = 0x4000, scoped, tag = 'output window, operand 0']
    #allocation4 [shape = 's32[2]{0}', space=sflag, size = 0x8, scoped, tag = 'scoped memory for tpu_custom_call.1']
    %8 = vsyncpa [#allocation4], 0
    %s9 = scalar_lea.sflag [#allocation4], 1
    %10 = vsyncpa %s9, 0
    loop: start=0, step=1, limit=4
    $region2: #{tpu_custom_call.1} parent=1 // loop_pre_header
      _
    $region3: #{tpu_custom_call.1} parent=1 // loop_header
      %s12 = sphi 0, %s16
      %p13 = scmp.ge.s32.totalorder %s12, 4
      %s22 = sphi 0, %s24
      %s25 = sphi 0, %s22
      %s26 = sphi 0, %s25
      %s42 = sphi 0, %s26
      %s46 = sphi 0, %s46
      %s48 = sphi 0, %s46
      %s49 = sphi 0, %s48
      %s63 = sphi 0, %s49
      %s67 = sphi 0, %s67
      %s69 = sphi 0, %s67
      %s70 = sphi 0, %s69
      %s84 = sphi 0, %s70
      %s90 = sphi 0, %s92
      %s93 = sphi 0, %s90
      %s94 = sphi 0, %s93
      %s110 = sphi 0, %s94
    $region4: #{tpu_custom_call.1} parent=1 // loop_header_branch
      %15 = sbr.rel (%p13) target = $region8
    $region5: #{tpu_custom_call.1} parent=1 // loop_body
      %s17 = ssub.s32 %s12, 1
      %s18 = ssub.s32 %s12, 2
      %s19 = sadd.s32 %s12, 1
      %s20 = ssub.s32 %s12, %s19
      %p21 = scmp.eq.s32.totalorder %s20, 0
      %s23 = sadd.s32 %s22, 1
      %s24 = scalar_select %p21, %s22, %s23
      %p27 = pneg %p21
      %p28 = scmp.eq.s32.totalorder %s12, 1
      %p29 = por %p27, %p28
      %p30 = scmp.ne.s32.totalorder %s22, %s25
      %p31 = scmp.eq.s32.totalorder %s12, 0
      %p32 = por %p30, %p31
      %p33 = scmp.ne.s32.totalorder %s22, %s25
      %p34 = scmp.eq.s32.totalorder %s17, 1
      %p35 = por %p33, %p34
      %p36 = scmp.ne.s32.totalorder %s25, %s26
      %p37 = scmp.eq.s32.totalorder %s17, 0
      %p38 = por %p36, %p37
      %p39 = scmp.ne.s32.totalorder %s25, %s26
      %p40 = scmp.eq.s32.totalorder %s18, 1
      %p41 = por %p39, %p40
      %p43 = scmp.ne.s32.totalorder %s26, %s42
      %p44 = scmp.eq.s32.totalorder %s18, 0
      %p45 = por %p43, %p44
      %s47 = sadd.s32 %s46, 1
      %p50 = scmp.eq.s32.totalorder %s12, 1
      %p51 = scmp.ne.s32.totalorder %s46, %s48
      %p52 = scmp.eq.s32.totalorder %s12, 0
      %p53 = por %p51, %p52
      %p54 = scmp.ne.s32.totalorder %s46, %s48
      %p55 = scmp.eq.s32.totalorder %s17, 1
      %p56 = por %p54, %p55
      %p57 = scmp.ne.s32.totalorder %s48, %s49
      %p58 = scmp.eq.s32.totalorder %s17, 0
      %p59 = por %p57, %p58
      %p60 = scmp.ne.s32.totalorder %s48, %s49
      %p61 = scmp.eq.s32.totalorder %s18, 1
      %p62 = por %p60, %p61
      %p64 = scmp.ne.s32.totalorder %s49, %s63
      %p65 = scmp.eq.s32.totalorder %s18, 0
      %p66 = por %p64, %p65
      %s68 = sadd.s32 %s67, 1
      %p71 = scmp.eq.s32.totalorder %s12, 1
      %p72 = scmp.ne.s32.totalorder %s67, %s69
      %p73 = scmp.eq.s32.totalorder %s12, 0
      %p74 = por %p72, %p73
      %p75 = scmp.ne.s32.totalorder %s67, %s69
      %p76 = scmp.eq.s32.totalorder %s17, 1
      %p77 = por %p75, %p76
      %p78 = scmp.ne.s32.totalorder %s69, %s70
      %p79 = scmp.eq.s32.totalorder %s17, 0
      %p80 = por %p78, %p79
      %p81 = scmp.ne.s32.totalorder %s69, %s70
      %p82 = scmp.eq.s32.totalorder %s18, 1
      %p83 = por %p81, %p82
      %p85 = scmp.ne.s32.totalorder %s70, %s84
      %p86 = scmp.eq.s32.totalorder %s18, 0
      %p87 = por %p85, %p86
      %s88 = ssub.s32 %s12, %s19
      %p89 = scmp.eq.s32.totalorder %s88, 0
      %s91 = sadd.s32 %s90, 1
      %s92 = scalar_select %p89, %s90, %s91
      %p95 = pneg %p89
      %p96 = scmp.eq.s32.totalorder %s12, 1
      %p97 = por %p95, %p96
      %p98 = scmp.ne.s32.totalorder %s90, %s93
      %p99 = scmp.eq.s32.totalorder %s12, 0
      %p100 = por %p98, %p99
      %p101 = scmp.ne.s32.totalorder %s90, %s93
      %p102 = scmp.eq.s32.totalorder %s17, 1
      %p103 = por %p101, %p102
      %p104 = scmp.ne.s32.totalorder %s93, %s94
      %p105 = scmp.eq.s32.totalorder %s17, 0
      %p106 = por %p104, %p105
      %p107 = scmp.ne.s32.totalorder %s93, %s94
      %p108 = scmp.eq.s32.totalorder %s18, 1
      %p109 = por %p107, %p108
      %p111 = scmp.ne.s32.totalorder %s94, %s110
      %p112 = scmp.eq.s32.totalorder %s18, 0
      %p113 = por %p111, %p112
      %p114 = scmp.le.s32.totalorder 1, %s12
      %p115 = scmp.lt.s32.totalorder %s12, 3
      %p116 = pnand %p114, %p115
      %p117 = pneg %p116
      // Predicated region
      $region9: #{tpu_custom_call.1} parent=5 // pred_check
        _
      $region10: #{tpu_custom_call.1} parent=5 // pred_check_branch
        %119 = sbr.rel (%p116) target = $region12
      $region11: #{tpu_custom_call.1} parent=5 // pred_region
        %s120 = ssub.s32 %s12, 1
        // Predicated region
        $region13: #{tpu_custom_call.1} parent=11 // pred_check
          %p121 = pneg %p59
        $region14: #{tpu_custom_call.1} parent=11 // pred_check_branch
          %123 = sbr.rel (%p121) target = $region16
        $region15: #{tpu_custom_call.1} parent=11 // pred_region
          _
        $region16: #{tpu_custom_call.1} parent=11 // pred_fallthru
          _
        // Predicated region
        $region17: #{tpu_custom_call.1} parent=11 // pred_check
          %p124 = pneg %p80
        $region18: #{tpu_custom_call.1} parent=11 // pred_check_branch
          %126 = sbr.rel (%p124) target = $region20
        $region19: #{tpu_custom_call.1} parent=11 // pred_region
          _
        $region20: #{tpu_custom_call.1} parent=11 // pred_fallthru
          _
      $region12: #{tpu_custom_call.1} parent=5 // pred_fallthru
        _
      %p127 = scmp.lt.s32.totalorder %s12, 2
      // Predicated region
      $region21: #{tpu_custom_call.1} parent=5 // pred_check
        %p128 = pneg %p127
      $region22: #{tpu_custom_call.1} parent=5 // pred_check_branch
        %130 = sbr.rel (%p128) target = $region24
      $region23: #{tpu_custom_call.1} parent=5 // pred_region
        // Predicated region
        $region25: #{tpu_custom_call.1} parent=23 // pred_check
          %p131 = pneg %p32
        $region26: #{tpu_custom_call.1} parent=23 // pred_check_branch
          %133 = sbr.rel (%p131) target = $region28
        $region27: #{tpu_custom_call.1} parent=23 // pred_region
          %p134 = scmp.lt.s32.totalorder %s12, 1
          %s135 = scalar_select %p134, %s12, 1
          %s136 = smul.addr %s135, 32
          %s137 = smul.addr %s136, 8
          %s138 = scalar_lea.vmem %s0, %s137
        $region28: #{tpu_custom_call.1} parent=23 // pred_fallthru
          _
      $region24: #{tpu_custom_call.1} parent=5 // pred_fallthru
        _
      %p139 = scmp.le.s32.totalorder 1, %s12
      %p140 = scmp.lt.s32.totalorder %s12, 3
      %p141 = pnand %p139, %p140
      %p142 = pneg %p141
      // Predicated region
      $region29: #{tpu_custom_call.1} parent=5 // pred_check
        _
      $region30: #{tpu_custom_call.1} parent=5 // pred_check_branch
        %144 = sbr.rel (%p141) target = $region32
      $region31: #{tpu_custom_call.1} parent=5 // pred_region
        %s145 = ssub.s32 %s12, 1
        %p146 = scmp.lt.s32.totalorder %s17, 1
        %s147 = scalar_select %p146, %s17, 1
        %s148 = smul.addr %s147, 32
        %s149 = smul.addr %s148, 8
        %s150 = scalar_lea.vmem %s0, %s149
        %p151 = pneg %p38
        %p152 = pneg %p35
        %p153 = pneg %p59
        %p154 = pneg %p56
        %p155 = pneg %p80
        %p156 = pneg %p77
        %p157 = pneg %p106
        %p158 = pneg %p103
        %s159 = sand.u32 %s93, 1
        %s160 = scalar_lea.sflag [#allocation4], %s159
        %s161 = sand.u32 %s93, 1
        %s162 = smul.addr %s161, 16
        %s163 = scalar_lea.vmem [#allocation3], %s162
        %p164 = scmp.lt.s32.totalorder %s17, 1
        %s165 = scalar_select %p164, %s17, 1
        %s166 = smul.addr %s165, 32
        %s167 = smul.addr %s166, 8
        %s168 = scalar_lea.vmem %s0, %s167
        %vm169 = vcmask 31744
        %170 = vst.msk [vmem:[#allocation2] sm:$0xff] %vm169, 0.0
        %171 = vst.msk [vmem:[#allocation2 + $0x8] sm:$0xff] %vm169, 0.0
        %vm172 = vcmask 25600
        %173 = vst.msk [vmem:[#allocation2 + $0x10] sm:$0x3] %vm172, 0.0
        %174 = vst.msk [vmem:[#allocation2 + $0x18] sm:$0xff] %vm169, 0.0
        %175 = vst.msk [vmem:[#allocation2 + $0x20] sm:$0xff] %vm169, 0.0
        %176 = vst.msk [vmem:[#allocation2 + $0x28] sm:$0x3] %vm172, 0.0
        %177 = vst.msk [vmem:[#allocation2 + $0x30] sm:$0xff] %vm169, 0.0
        %178 = vst.msk [vmem:[#allocation2 + $0x38] sm:$0xff] %vm169, 0.0
        %179 = vst.msk [vmem:[#allocation2 + $0x40] sm:$0x3] %vm172, 0.0
        %180 = vst.msk [vmem:[#allocation2 + $0x48] sm:$0xff] %vm169, 0.0
        %181 = vst.msk [vmem:[#allocation2 + $0x50] sm:$0xff] %vm169, 0.0
        %182 = vst.msk [vmem:[#allocation2 + $0x58] sm:$0x3] %vm172, 0.0
        %183 = vst.msk [vmem:[#allocation2 + $0x60] sm:$0xff] %vm169, 0.0
        %184 = vst.msk [vmem:[#allocation2 + $0x68] sm:$0xff] %vm169, 0.0
        %185 = vst.msk [vmem:[#allocation2 + $0x70] sm:$0x3] %vm172, 0.0
        %186 = vst.msk [vmem:[#allocation2 + $0x78] sm:$0xff] %vm169, 0.0
        %187 = vst.msk [vmem:[#allocation2 + $0x80] sm:$0xff] %vm169, 0.0
        %188 = vst.msk [vmem:[#allocation2 + $0x88] sm:$0x3] %vm172, 0.0
        %189 = vst.msk [vmem:[#allocation2 + $0x90] sm:$0xff] %vm169, 0.0
        %190 = vst.msk [vmem:[#allocation2 + $0x98] sm:$0xff] %vm169, 0.0
        %191 = vst.msk [vmem:[#allocation2 + $0xa0] sm:$0x3] %vm172, 0.0
        %192 = vst.msk [vmem:[#allocation2 + $0xa8] sm:$0xff] %vm169, 0.0
        %193 = vst.msk [vmem:[#allocation2 + $0xb0] sm:$0xff] %vm169, 0.0
        %194 = vst.msk [vmem:[#allocation2 + $0xb8] sm:$0x3] %vm172, 0.0
        %195 = vst.msk [vmem:[#allocation2 + $0xc0] sm:$0xff] %vm169, 0.0
        %196 = vst.msk [vmem:[#allocation2 + $0xc8] sm:$0xff] %vm169, 0.0
        %197 = vst.msk [vmem:[#allocation2 + $0xd0] sm:$0x3] %vm172, 0.0
        %198 = vst.msk [vmem:[#allocation2 + $0xd8] sm:$0xff] %vm169, 0.0
        %199 = vst.msk [vmem:[#allocation2 + $0xe0] sm:$0xff] %vm169, 0.0
        %200 = vst.msk [vmem:[#allocation2 + $0xe8] sm:$0x3] %vm172, 0.0
        %201 = vst.msk [vmem:[#allocation2 + $0xf0] sm:$0xff] %vm169, 0.0
        %202 = vst.msk [vmem:[#allocation2 + $0xf8] sm:$0xff] %vm169, 0.0
        %203 = vst.msk [vmem:[#allocation2 + $0x100] sm:$0x3] %vm172, 0.0
        %204 = vst.msk [vmem:[#allocation2 + $0x108] sm:$0xff] %vm169, 0.0
        %205 = vst.msk [vmem:[#allocation2 + $0x110] sm:$0xff] %vm169, 0.0
        %206 = vst.msk [vmem:[#allocation2 + $0x118] sm:$0x3] %vm172, 0.0
        %207 = vst.msk [vmem:[#allocation2 + $0x120] sm:$0xff] %vm169, 0.0
        %208 = vst.msk [vmem:[#allocation2 + $0x128] sm:$0xff] %vm169, 0.0
        %209 = vst.msk [vmem:[#allocation2 + $0x130] sm:$0x3] %vm172, 0.0
        %210 = vst.msk [vmem:[#allocation2 + $0x138] sm:$0xff] %vm169, 0.0
        %211 = vst.msk [vmem:[#allocation2 + $0x140] sm:$0xff] %vm169, 0.0
        %212 = vst.msk [vmem:[#allocation2 + $0x148] sm:$0x3] %vm172, 0.0
        %213 = vst.msk [vmem:[#allocation2 + $0x150] sm:$0xff] %vm169, 0.0
        %214 = vst.msk [vmem:[#allocation2 + $0x158] sm:$0xff] %vm169, 0.0
        %215 = vst.msk [vmem:[#allocation2 + $0x160] sm:$0x3] %vm172, 0.0
        %216 = vst.msk [vmem:[#allocation2 + $0x168] sm:$0xff] %vm169, 0.0
        %217 = vst.msk [vmem:[#allocation2 + $0x170] sm:$0xff] %vm169, 0.0
        %218 = vst.msk [vmem:[#allocation2 + $0x178] sm:$0x3] %vm172, 0.0
        %219 = vst.msk [vmem:[#allocation2 + $0x180] sm:$0xff] %vm169, 0.0
        %220 = vst.msk [vmem:[#allocation2 + $0x188] sm:$0xff] %vm169, 0.0
        %221 = vst.msk [vmem:[#allocation2 + $0x190] sm:$0x3] %vm172, 0.0
        %222 = vst.msk [vmem:[#allocation2 + $0x198] sm:$0xff] %vm169, 0.0
        %223 = vst.msk [vmem:[#allocation2 + $0x1a0] sm:$0xff] %vm169, 0.0
        %224 = vst.msk [vmem:[#allocation2 + $0x1a8] sm:$0x3] %vm172, 0.0
        %v225 = vld [vmem:[%s168] sm:$0xff]
        %v226 = vld [vmem:[%s168 + $0x8] sm:$0xff]
        %v227 = vld [vmem:[%s168 + $0x10] sm:$0xff]
        %v228 = vld [vmem:[%s168 + $0x18] sm:$0xff]
        %v229 = vld [vmem:[%s168 + $0x20] sm:$0xff]
        %v230 = vld [vmem:[%s168 + $0x28] sm:$0xff]
        %v231 = vld [vmem:[%s168 + $0x30] sm:$0xff]
        %v232 = vld [vmem:[%s168 + $0x38] sm:$0xff]
        %v233 = vld [vmem:[%s168 + $0x40] sm:$0xff]
        %v234 = vld [vmem:[%s168 + $0x48] sm:$0xff]
        %v235 = vld [vmem:[%s168 + $0x50] sm:$0xff]
        %v236 = vld [vmem:[%s168 + $0x58] sm:$0xff]
        %v237 = vld [vmem:[%s168 + $0x60] sm:$0xff]
        %v238 = vld [vmem:[%s168 + $0x68] sm:$0xff]
        %v239 = vld [vmem:[%s168 + $0x70] sm:$0xff]
        %v240 = vld [vmem:[%s168 + $0x78] sm:$0xff]
        %v241 = vld [vmem:[%s168 + $0x80] sm:$0xff]
        %v242 = vld [vmem:[%s168 + $0x88] sm:$0xff]
        %v243 = vld [vmem:[%s168 + $0x90] sm:$0xff]
        %v244 = vld [vmem:[%s168 + $0x98] sm:$0xff]
        %v245 = vld [vmem:[%s168 + $0xa0] sm:$0xff]
        %v246 = vld [vmem:[%s168 + $0xa8] sm:$0xff]
        %v247 = vld [vmem:[%s168 + $0xb0] sm:$0xff]
        %v248 = vld [vmem:[%s168 + $0xb8] sm:$0xff]
        %v249 = vld [vmem:[%s168 + $0xc0] sm:$0xff]
        %v250 = vld [vmem:[%s168 + $0xc8] sm:$0xff]
        %v251 = vld [vmem:[%s168 + $0xd0] sm:$0xff]
        %v252 = vld [vmem:[%s168 + $0xd8] sm:$0xff]
        %v253 = vld [vmem:[%s168 + $0xe0] sm:$0xff]
        %v254 = vld [vmem:[%s168 + $0xe8] sm:$0xff]
        %v255 = vld [vmem:[%s168 + $0xf0] sm:$0xff]
        %v256 = vld [vmem:[%s168 + $0xf8] sm:$0xff]
        %s257 = scalar_lea.vmem [#allocation2], 24
        %258 = vst.msk [vmem:[%s257 + $0x1] sm:$0xff] %vm169, %v225
        %259 = vst.msk [vmem:[%s257 + $0x9] sm:$0xff] %vm169, %v226
        %260 = vst.msk [vmem:[%s257 + $0x19] sm:$0xff] %vm169, %v227
        %261 = vst.msk [vmem:[%s257 + $0x21] sm:$0xff] %vm169, %v228
        %262 = vst.msk [vmem:[%s257 + $0x31] sm:$0xff] %vm169, %v229
        %263 = vst.msk [vmem:[%s257 + $0x39] sm:$0xff] %vm169, %v230
        %264 = vst.msk [vmem:[%s257 + $0x49] sm:$0xff] %vm169, %v231
        %265 = vst.msk [vmem:[%s257 + $0x51] sm:$0xff] %vm169, %v232
        %266 = vst.msk [vmem:[%s257 + $0x61] sm:$0xff] %vm169, %v233
        %267 = vst.msk [vmem:[%s257 + $0x69] sm:$0xff] %vm169, %v234
        %268 = vst.msk [vmem:[%s257 + $0x79] sm:$0xff] %vm169, %v235
        %269 = vst.msk [vmem:[%s257 + $0x81] sm:$0xff] %vm169, %v236
        %270 = vst.msk [vmem:[%s257 + $0x91] sm:$0xff] %vm169, %v237
        %271 = vst.msk [vmem:[%s257 + $0x99] sm:$0xff] %vm169, %v238
        %272 = vst.msk [vmem:[%s257 + $0xa9] sm:$0xff] %vm169, %v239
        %273 = vst.msk [vmem:[%s257 + $0xb1] sm:$0xff] %vm169, %v240
        %274 = vst.msk [vmem:[%s257 + $0xc1] sm:$0xff] %vm169, %v241
        %275 = vst.msk [vmem:[%s257 + $0xc9] sm:$0xff] %vm169, %v242
        %276 = vst.msk [vmem:[%s257 + $0xd9] sm:$0xff] %vm169, %v243
        %277 = vst.msk [vmem:[%s257 + $0xe1] sm:$0xff] %vm169, %v244
        %278 = vst.msk [vmem:[%s257 + $0xf1] sm:$0xff] %vm169, %v245
        %279 = vst.msk [vmem:[%s257 + $0xf9] sm:$0xff] %vm169, %v246
        %280 = vst.msk [vmem:[%s257 + $0x109] sm:$0xff] %vm169, %v247
        %281 = vst.msk [vmem:[%s257 + $0x111] sm:$0xff] %vm169, %v248
        %282 = vst.msk [vmem:[%s257 + $0x121] sm:$0xff] %vm169, %v249
        %283 = vst.msk [vmem:[%s257 + $0x129] sm:$0xff] %vm169, %v250
        %284 = vst.msk [vmem:[%s257 + $0x139] sm:$0xff] %vm169, %v251
        %285 = vst.msk [vmem:[%s257 + $0x141] sm:$0xff] %vm169, %v252
        %286 = vst.msk [vmem:[%s257 + $0x151] sm:$0xff] %vm169, %v253
        %287 = vst.msk [vmem:[%s257 + $0x159] sm:$0xff] %vm169, %v254
        %288 = vst.msk [vmem:[%s257 + $0x169] sm:$0xff] %vm169, %v255
        %289 = vst.msk [vmem:[%s257 + $0x171] sm:$0xff] %vm169, %v256
        %v290 = vld [vmem:[#allocation2] sm:$0xff]
        %v291 = vld [vmem:[#allocation2 + $0x8] sm:$0xff]
        %v292 = vld [vmem:[#allocation2 + $0x18] sm:$0xff]
        %v293 = vld [vmem:[#allocation2 + $0x20] sm:$0xff]
        %v294 = vld [vmem:[#allocation2 + $0x30] sm:$0xff]
        %v295 = vld [vmem:[#allocation2 + $0x38] sm:$0xff]
        %v296 = vld [vmem:[#allocation2 + $0x48] sm:$0xff]
        %v297 = vld [vmem:[#allocation2 + $0x50] sm:$0xff]
        %v298 = vld [vmem:[#allocation2 + $0x60] sm:$0xff]
        %v299 = vld [vmem:[#allocation2 + $0x68] sm:$0xff]
        %v300 = vld [vmem:[#allocation2 + $0x78] sm:$0xff]
        %v301 = vld [vmem:[#allocation2 + $0x80] sm:$0xff]
        %v302 = vld [vmem:[#allocation2 + $0x90] sm:$0xff]
        %v303 = vld [vmem:[#allocation2 + $0x98] sm:$0xff]
        %v304 = vld [vmem:[#allocation2 + $0xa8] sm:$0xff]
        %v305 = vld [vmem:[#allocation2 + $0xb0] sm:$0xff]
        %v306 = vld [vmem:[#allocation2 + $0xc0] sm:$0xff]
        %v307 = vld [vmem:[#allocation2 + $0xc8] sm:$0xff]
        %v308 = vld [vmem:[#allocation2 + $0xd8] sm:$0xff]
        %v309 = vld [vmem:[#allocation2 + $0xe0] sm:$0xff]
        %v310 = vld [vmem:[#allocation2 + $0xf0] sm:$0xff]
        %v311 = vld [vmem:[#allocation2 + $0xf8] sm:$0xff]
        %v312 = vld [vmem:[#allocation2 + $0x108] sm:$0xff]
        %v313 = vld [vmem:[#allocation2 + $0x110] sm:$0xff]
        %v314 = vld [vmem:[#allocation2 + $0x120] sm:$0xff]
        %v315 = vld [vmem:[#allocation2 + $0x128] sm:$0xff]
        %v316 = vld [vmem:[#allocation2 + $0x138] sm:$0xff]
        %v317 = vld [vmem:[#allocation2 + $0x140] sm:$0xff]
        %v318 = vld [vmem:[#allocation2 + $0x150] sm:$0xff]
        %v319 = vld [vmem:[#allocation2 + $0x158] sm:$0xff]
        %v320 = vld [vmem:[#allocation2 + $0x168] sm:$0xff]
        %v321 = vld [vmem:[#allocation2 + $0x170] sm:$0xff]
        %v322 = vld [vmem:[#allocation2 + $0x1] sm:$0xff]
        %v323 = vld [vmem:[#allocation2 + $0x9] sm:$0xff]
        %v324 = vld [vmem:[#allocation2 + $0x19] sm:$0xff]
        %v325 = vld [vmem:[#allocation2 + $0x21] sm:$0xff]
        %v326 = vld [vmem:[#allocation2 + $0x31] sm:$0xff]
        %v327 = vld [vmem:[#allocation2 + $0x39] sm:$0xff]
        %v328 = vld [vmem:[#allocation2 + $0x49] sm:$0xff]
        %v329 = vld [vmem:[#allocation2 + $0x51] sm:$0xff]
        %v330 = vld [vmem:[#allocation2 + $0x61] sm:$0xff]
        %v331 = vld [vmem:[#allocation2 + $0x69] sm:$0xff]
        %v332 = vld [vmem:[#allocation2 + $0x79] sm:$0xff]
        %v333 = vld [vmem:[#allocation2 + $0x81] sm:$0xff]
        %v334 = vld [vmem:[#allocation2 + $0x91] sm:$0xff]
        %v335 = vld [vmem:[#allocation2 + $0x99] sm:$0xff]
        %v336 = vld [vmem:[#allocation2 + $0xa9] sm:$0xff]
        %v337 = vld [vmem:[#allocation2 + $0xb1] sm:$0xff]
        %v338 = vld [vmem:[#allocation2 + $0xc1] sm:$0xff]
        %v339 = vld [vmem:[#allocation2 + $0xc9] sm:$0xff]
        %v340 = vld [vmem:[#allocation2 + $0xd9] sm:$0xff]
        %v341 = vld [vmem:[#allocation2 + $0xe1] sm:$0xff]
        %v342 = vld [vmem:[#allocation2 + $0xf1] sm:$0xff]
        %v343 = vld [vmem:[#allocation2 + $0xf9] sm:$0xff]
        %v344 = vld [vmem:[#allocation2 + $0x109] sm:$0xff]
        %v345 = vld [vmem:[#allocation2 + $0x111] sm:$0xff]
        %v346 = vld [vmem:[#allocation2 + $0x121] sm:$0xff]
        %v347 = vld [vmem:[#allocation2 + $0x129] sm:$0xff]
        %v348 = vld [vmem:[#allocation2 + $0x139] sm:$0xff]
        %v349 = vld [vmem:[#allocation2 + $0x141] sm:$0xff]
        %v350 = vld [vmem:[#allocation2 + $0x151] sm:$0xff]
        %v351 = vld [vmem:[#allocation2 + $0x159] sm:$0xff]
        %v352 = vld [vmem:[#allocation2 + $0x169] sm:$0xff]
        %v353 = vld [vmem:[#allocation2 + $0x171] sm:$0xff]
        %v354 = vld [vmem:[#allocation2 + $0x2] sm:$0xff]
        %v355 = vld [vmem:[#allocation2 + $0xa] sm:$0xff]
        %v356 = vld [vmem:[#allocation2 + $0x1a] sm:$0xff]
        %v357 = vld [vmem:[#allocation2 + $0x22] sm:$0xff]
        %v358 = vld [vmem:[#allocation2 + $0x32] sm:$0xff]
        %v359 = vld [vmem:[#allocation2 + $0x3a] sm:$0xff]
        %v360 = vld [vmem:[#allocation2 + $0x4a] sm:$0xff]
        %v361 = vld [vmem:[#allocation2 + $0x52] sm:$0xff]
        %v362 = vld [vmem:[#allocation2 + $0x62] sm:$0xff]
        %v363 = vld [vmem:[#allocation2 + $0x6a] sm:$0xff]
        %v364 = vld [vmem:[#allocation2 + $0x7a] sm:$0xff]
        %v365 = vld [vmem:[#allocation2 + $0x82] sm:$0xff]
        %v366 = vld [vmem:[#allocation2 + $0x92] sm:$0xff]
        %v367 = vld [vmem:[#allocation2 + $0x9a] sm:$0xff]
        %v368 = vld [vmem:[#allocation2 + $0xaa] sm:$0xff]
        %v369 = vld [vmem:[#allocation2 + $0xb2] sm:$0xff]
        %v370 = vld [vmem:[#allocation2 + $0xc2] sm:$0xff]
        %v371 = vld [vmem:[#allocation2 + $0xca] sm:$0xff]
        %v372 = vld [vmem:[#allocation2 + $0xda] sm:$0xff]
        %v373 = vld [vmem:[#allocation2 + $0xe2] sm:$0xff]
        %v374 = vld [vmem:[#allocation2 + $0xf2] sm:$0xff]
        %v375 = vld [vmem:[#allocation2 + $0xfa] sm:$0xff]
        %v376 = vld [vmem:[#allocation2 + $0x10a] sm:$0xff]
        %v377 = vld [vmem:[#allocation2 + $0x112] sm:$0xff]
        %v378 = vld [vmem:[#allocation2 + $0x122] sm:$0xff]
        %v379 = vld [vmem:[#allocation2 + $0x12a] sm:$0xff]
        %v380 = vld [vmem:[#allocation2 + $0x13a] sm:$0xff]
        %v381 = vld [vmem:[#allocation2 + $0x142] sm:$0xff]
        %v382 = vld [vmem:[#allocation2 + $0x152] sm:$0xff]
        %v383 = vld [vmem:[#allocation2 + $0x15a] sm:$0xff]
        %v384 = vld [vmem:[#allocation2 + $0x16a] sm:$0xff]
        %v385 = vld [vmem:[#allocation2 + $0x172] sm:$0xff]
        %v386 = vld [vmem:[%s257] sm:$0xff]
        %v387 = vld [vmem:[%s257 + $0x8] sm:$0xff]
        %v388 = vld [vmem:[%s257 + $0x18] sm:$0xff]
        %v389 = vld [vmem:[%s257 + $0x20] sm:$0xff]
        %v390 = vld [vmem:[%s257 + $0x30] sm:$0xff]
        %v391 = vld [vmem:[%s257 + $0x38] sm:$0xff]
        %v392 = vld [vmem:[%s257 + $0x48] sm:$0xff]
        %v393 = vld [vmem:[%s257 + $0x50] sm:$0xff]
        %v394 = vld [vmem:[%s257 + $0x60] sm:$0xff]
        %v395 = vld [vmem:[%s257 + $0x68] sm:$0xff]
        %v396 = vld [vmem:[%s257 + $0x78] sm:$0xff]
        %v397 = vld [vmem:[%s257 + $0x80] sm:$0xff]
        %v398 = vld [vmem:[%s257 + $0x90] sm:$0xff]
        %v399 = vld [vmem:[%s257 + $0x98] sm:$0xff]
        %v400 = vld [vmem:[%s257 + $0xa8] sm:$0xff]
        %v401 = vld [vmem:[%s257 + $0xb0] sm:$0xff]
        %v402 = vld [vmem:[%s257 + $0xc0] sm:$0xff]
        %v403 = vld [vmem:[%s257 + $0xc8] sm:$0xff]
        %v404 = vld [vmem:[%s257 + $0xd8] sm:$0xff]
        %v405 = vld [vmem:[%s257 + $0xe0] sm:$0xff]
        %v406 = vld [vmem:[%s257 + $0xf0] sm:$0xff]
        %v407 = vld [vmem:[%s257 + $0xf8] sm:$0xff]
        %v408 = vld [vmem:[%s257 + $0x108] sm:$0xff]
        %v409 = vld [vmem:[%s257 + $0x110] sm:$0xff]
        %v410 = vld [vmem:[%s257 + $0x120] sm:$0xff]
        %v411 = vld [vmem:[%s257 + $0x128] sm:$0xff]
        %v412 = vld [vmem:[%s257 + $0x138] sm:$0xff]
        %v413 = vld [vmem:[%s257 + $0x140] sm:$0xff]
        %v414 = vld [vmem:[%s257 + $0x150] sm:$0xff]
        %v415 = vld [vmem:[%s257 + $0x158] sm:$0xff]
        %v416 = vld [vmem:[%s257 + $0x168] sm:$0xff]
        %v417 = vld [vmem:[%s257 + $0x170] sm:$0xff]
        %v418 = vld [vmem:[%s257 + $0x1] sm:$0xff]
        %v419 = vld [vmem:[%s257 + $0x9] sm:$0xff]
        %v420 = vld [vmem:[%s257 + $0x19] sm:$0xff]
        %v421 = vld [vmem:[%s257 + $0x21] sm:$0xff]
        %v422 = vld [vmem:[%s257 + $0x31] sm:$0xff]
        %v423 = vld [vmem:[%s257 + $0x39] sm:$0xff]
        %v424 = vld [vmem:[%s257 + $0x49] sm:$0xff]
        %v425 = vld [vmem:[%s257 + $0x51] sm:$0xff]
        %v426 = vld [vmem:[%s257 + $0x61] sm:$0xff]
        %v427 = vld [vmem:[%s257 + $0x69] sm:$0xff]
        %v428 = vld [vmem:[%s257 + $0x79] sm:$0xff]
        %v429 = vld [vmem:[%s257 + $0x81] sm:$0xff]
        %v430 = vld [vmem:[%s257 + $0x91] sm:$0xff]
        %v431 = vld [vmem:[%s257 + $0x99] sm:$0xff]
        %v432 = vld [vmem:[%s257 + $0xa9] sm:$0xff]
        %v433 = vld [vmem:[%s257 + $0xb1] sm:$0xff]
        %v434 = vld [vmem:[%s257 + $0xc1] sm:$0xff]
        %v435 = vld [vmem:[%s257 + $0xc9] sm:$0xff]
        %v436 = vld [vmem:[%s257 + $0xd9] sm:$0xff]
        %v437 = vld [vmem:[%s257 + $0xe1] sm:$0xff]
        %v438 = vld [vmem:[%s257 + $0xf1] sm:$0xff]
        %v439 = vld [vmem:[%s257 + $0xf9] sm:$0xff]
        %v440 = vld [vmem:[%s257 + $0x109] sm:$0xff]
        %v441 = vld [vmem:[%s257 + $0x111] sm:$0xff]
        %v442 = vld [vmem:[%s257 + $0x121] sm:$0xff]
        %v443 = vld [vmem:[%s257 + $0x129] sm:$0xff]
        %v444 = vld [vmem:[%s257 + $0x139] sm:$0xff]
        %v445 = vld [vmem:[%s257 + $0x141] sm:$0xff]
        %v446 = vld [vmem:[%s257 + $0x151] sm:$0xff]
        %v447 = vld [vmem:[%s257 + $0x159] sm:$0xff]
        %v448 = vld [vmem:[%s257 + $0x169] sm:$0xff]
        %v449 = vld [vmem:[%s257 + $0x171] sm:$0xff]
        %v450 = vld [vmem:[%s257 + $0x2] sm:$0xff]
        %v451 = vld [vmem:[%s257 + $0xa] sm:$0xff]
        %v452 = vld [vmem:[%s257 + $0x1a] sm:$0xff]
        %v453 = vld [vmem:[%s257 + $0x22] sm:$0xff]
        %v454 = vld [vmem:[%s257 + $0x32] sm:$0xff]
        %v455 = vld [vmem:[%s257 + $0x3a] sm:$0xff]
        %v456 = vld [vmem:[%s257 + $0x4a] sm:$0xff]
        %v457 = vld [vmem:[%s257 + $0x52] sm:$0xff]
        %v458 = vld [vmem:[%s257 + $0x62] sm:$0xff]
        %v459 = vld [vmem:[%s257 + $0x6a] sm:$0xff]
        %v460 = vld [vmem:[%s257 + $0x7a] sm:$0xff]
        %v461 = vld [vmem:[%s257 + $0x82] sm:$0xff]
        %v462 = vld [vmem:[%s257 + $0x92] sm:$0xff]
        %v463 = vld [vmem:[%s257 + $0x9a] sm:$0xff]
        %v464 = vld [vmem:[%s257 + $0xaa] sm:$0xff]
        %v465 = vld [vmem:[%s257 + $0xb2] sm:$0xff]
        %v466 = vld [vmem:[%s257 + $0xc2] sm:$0xff]
        %v467 = vld [vmem:[%s257 + $0xca] sm:$0xff]
        %v468 = vld [vmem:[%s257 + $0xda] sm:$0xff]
        %v469 = vld [vmem:[%s257 + $0xe2] sm:$0xff]
        %v470 = vld [vmem:[%s257 + $0xf2] sm:$0xff]
        %v471 = vld [vmem:[%s257 + $0xfa] sm:$0xff]
        %v472 = vld [vmem:[%s257 + $0x10a] sm:$0xff]
        %v473 = vld [vmem:[%s257 + $0x112] sm:$0xff]
        %v474 = vld [vmem:[%s257 + $0x122] sm:$0xff]
        %v475 = vld [vmem:[%s257 + $0x12a] sm:$0xff]
        %v476 = vld [vmem:[%s257 + $0x13a] sm:$0xff]
        %v477 = vld [vmem:[%s257 + $0x142] sm:$0xff]
        %v478 = vld [vmem:[%s257 + $0x152] sm:$0xff]
        %v479 = vld [vmem:[%s257 + $0x15a] sm:$0xff]
        %v480 = vld [vmem:[%s257 + $0x16a] sm:$0xff]
        %v481 = vld [vmem:[%s257 + $0x172] sm:$0xff]
        %s482 = scalar_lea.vmem [#allocation2], 48
        %v483 = vld [vmem:[%s482] sm:$0xff]
        %v484 = vld [vmem:[%s482 + $0x8] sm:$0xff]
        %v485 = vld [vmem:[%s482 + $0x18] sm:$0xff]
        %v486 = vld [vmem:[%s482 + $0x20] sm:$0xff]
        %v487 = vld [vmem:[%s482 + $0x30] sm:$0xff]
        %v488 = vld [vmem:[%s482 + $0x38] sm:$0xff]
        %v489 = vld [vmem:[%s482 + $0x48] sm:$0xff]
        %v490 = vld [vmem:[%s482 + $0x50] sm:$0xff]
        %v491 = vld [vmem:[%s482 + $0x60] sm:$0xff]
        %v492 = vld [vmem:[%s482 + $0x68] sm:$0xff]
        %v493 = vld [vmem:[%s482 + $0x78] sm:$0xff]
        %v494 = vld [vmem:[%s482 + $0x80] sm:$0xff]
        %v495 = vld [vmem:[%s482 + $0x90] sm:$0xff]
        %v496 = vld [vmem:[%s482 + $0x98] sm:$0xff]
        %v497 = vld [vmem:[%s482 + $0xa8] sm:$0xff]
        %v498 = vld [vmem:[%s482 + $0xb0] sm:$0xff]
        %v499 = vld [vmem:[%s482 + $0xc0] sm:$0xff]
        %v500 = vld [vmem:[%s482 + $0xc8] sm:$0xff]
        %v501 = vld [vmem:[%s482 + $0xd8] sm:$0xff]
        %v502 = vld [vmem:[%s482 + $0xe0] sm:$0xff]
        %v503 = vld [vmem:[%s482 + $0xf0] sm:$0xff]
        %v504 = vld [vmem:[%s482 + $0xf8] sm:$0xff]
        %v505 = vld [vmem:[%s482 + $0x108] sm:$0xff]
        %v506 = vld [vmem:[%s482 + $0x110] sm:$0xff]
        %v507 = vld [vmem:[%s482 + $0x120] sm:$0xff]
        %v508 = vld [vmem:[%s482 + $0x128] sm:$0xff]
        %v509 = vld [vmem:[%s482 + $0x138] sm:$0xff]
        %v510 = vld [vmem:[%s482 + $0x140] sm:$0xff]
        %v511 = vld [vmem:[%s482 + $0x150] sm:$0xff]
        %v512 = vld [vmem:[%s482 + $0x158] sm:$0xff]
        %v513 = vld [vmem:[%s482 + $0x168] sm:$0xff]
        %v514 = vld [vmem:[%s482 + $0x170] sm:$0xff]
        %v515 = vld [vmem:[%s482 + $0x1] sm:$0xff]
        %v516 = vld [vmem:[%s482 + $0x9] sm:$0xff]
        %v517 = vld [vmem:[%s482 + $0x19] sm:$0xff]
        %v518 = vld [vmem:[%s482 + $0x21] sm:$0xff]
        %v519 = vld [vmem:[%s482 + $0x31] sm:$0xff]
        %v520 = vld [vmem:[%s482 + $0x39] sm:$0xff]
        %v521 = vld [vmem:[%s482 + $0x49] sm:$0xff]
        %v522 = vld [vmem:[%s482 + $0x51] sm:$0xff]
        %v523 = vld [vmem:[%s482 + $0x61] sm:$0xff]
        %v524 = vld [vmem:[%s482 + $0x69] sm:$0xff]
        %v525 = vld [vmem:[%s482 + $0x79] sm:$0xff]
        %v526 = vld [vmem:[%s482 + $0x81] sm:$0xff]
        %v527 = vld [vmem:[%s482 + $0x91] sm:$0xff]
        %v528 = vld [vmem:[%s482 + $0x99] sm:$0xff]
        %v529 = vld [vmem:[%s482 + $0xa9] sm:$0xff]
        %v530 = vld [vmem:[%s482 + $0xb1] sm:$0xff]
        %v531 = vld [vmem:[%s482 + $0xc1] sm:$0xff]
        %v532 = vld [vmem:[%s482 + $0xc9] sm:$0xff]
        %v533 = vld [vmem:[%s482 + $0xd9] sm:$0xff]
        %v534 = vld [vmem:[%s482 + $0xe1] sm:$0xff]
        %v535 = vld [vmem:[%s482 + $0xf1] sm:$0xff]
        %v536 = vld [vmem:[%s482 + $0xf9] sm:$0xff]
        %v537 = vld [vmem:[%s482 + $0x109] sm:$0xff]
        %v538 = vld [vmem:[%s482 + $0x111] sm:$0xff]
        %v539 = vld [vmem:[%s482 + $0x121] sm:$0xff]
        %v540 = vld [vmem:[%s482 + $0x129] sm:$0xff]
        %v541 = vld [vmem:[%s482 + $0x139] sm:$0xff]
        %v542 = vld [vmem:[%s482 + $0x141] sm:$0xff]
        %v543 = vld [vmem:[%s482 + $0x151] sm:$0xff]
        %v544 = vld [vmem:[%s482 + $0x159] sm:$0xff]
        %v545 = vld [vmem:[%s482 + $0x169] sm:$0xff]
        %v546 = vld [vmem:[%s482 + $0x171] sm:$0xff]
        %v547 = vld [vmem:[%s482 + $0x2] sm:$0xff]
        %v548 = vld [vmem:[%s482 + $0xa] sm:$0xff]
        %v549 = vld [vmem:[%s482 + $0x1a] sm:$0xff]
        %v550 = vld [vmem:[%s482 + $0x22] sm:$0xff]
        %v551 = vld [vmem:[%s482 + $0x32] sm:$0xff]
        %v552 = vld [vmem:[%s482 + $0x3a] sm:$0xff]
        %v553 = vld [vmem:[%s482 + $0x4a] sm:$0xff]
        %v554 = vld [vmem:[%s482 + $0x52] sm:$0xff]
        %v555 = vld [vmem:[%s482 + $0x62] sm:$0xff]
        %v556 = vld [vmem:[%s482 + $0x6a] sm:$0xff]
        %v557 = vld [vmem:[%s482 + $0x7a] sm:$0xff]
        %v558 = vld [vmem:[%s482 + $0x82] sm:$0xff]
        %v559 = vld [vmem:[%s482 + $0x92] sm:$0xff]
        %v560 = vld [vmem:[%s482 + $0x9a] sm:$0xff]
        %v561 = vld [vmem:[%s482 + $0xaa] sm:$0xff]
        %v562 = vld [vmem:[%s482 + $0xb2] sm:$0xff]
        %v563 = vld [vmem:[%s482 + $0xc2] sm:$0xff]
        %v564 = vld [vmem:[%s482 + $0xca] sm:$0xff]
        %v565 = vld [vmem:[%s482 + $0xda] sm:$0xff]
        %v566 = vld [vmem:[%s482 + $0xe2] sm:$0xff]
        %v567 = vld [vmem:[%s482 + $0xf2] sm:$0xff]
        %v568 = vld [vmem:[%s482 + $0xfa] sm:$0xff]
        %v569 = vld [vmem:[%s482 + $0x10a] sm:$0xff]
        %v570 = vld [vmem:[%s482 + $0x112] sm:$0xff]
        %v571 = vld [vmem:[%s482 + $0x122] sm:$0xff]
        %v572 = vld [vmem:[%s482 + $0x12a] sm:$0xff]
        %v573 = vld [vmem:[%s482 + $0x13a] sm:$0xff]
        %v574 = vld [vmem:[%s482 + $0x142] sm:$0xff]
        %v575 = vld [vmem:[%s482 + $0x152] sm:$0xff]
        %v576 = vld [vmem:[%s482 + $0x15a] sm:$0xff]
        %v577 = vld [vmem:[%s482 + $0x16a] sm:$0xff]
        %v578 = vld [vmem:[%s482 + $0x172] sm:$0xff]
        %611 = vrot.lane.b32.xlu0 %v322, 4
        %v612 = vpop.permute.xlu0 %611
        %613 = vrot.lane.b32.xlu0 %v323, 4
        %v614 = vpop.permute.xlu0 %613
        %615 = vrot.lane.b32.xlu0 %v324, 4
        %v616 = vpop.permute.xlu0 %615
        %617 = vrot.lane.b32.xlu0 %v325, 4
        %v618 = vpop.permute.xlu0 %617
        %619 = vrot.lane.b32.xlu0 %v326, 4
        %v620 = vpop.permute.xlu0 %619
        %621 = vrot.lane.b32.xlu0 %v327, 4
        %v622 = vpop.permute.xlu0 %621
        %623 = vrot.lane.b32.xlu0 %v328, 4
        %v624 = vpop.permute.xlu0 %623
        %625 = vrot.lane.b32.xlu0 %v329, 4
        %v626 = vpop.permute.xlu0 %625
        %627 = vrot.lane.b32.xlu0 %v330, 4
        %v628 = vpop.permute.xlu0 %627
        %629 = vrot.lane.b32.xlu0 %v331, 4
        %v630 = vpop.permute.xlu0 %629
        %631 = vrot.lane.b32.xlu0 %v332, 4
        %v632 = vpop.permute.xlu0 %631
        %633 = vrot.lane.b32.xlu0 %v333, 4
        %v634 = vpop.permute.xlu0 %633
        %635 = vrot.lane.b32.xlu0 %v334, 4
        %v636 = vpop.permute.xlu0 %635
        %637 = vrot.lane.b32.xlu0 %v335, 4
        %v638 = vpop.permute.xlu0 %637
        %639 = vrot.lane.b32.xlu0 %v336, 4
        %v640 = vpop.permute.xlu0 %639
        %641 = vrot.lane.b32.xlu0 %v337, 4
        %v642 = vpop.permute.xlu0 %641
        %643 = vrot.lane.b32.xlu0 %v338, 4
        %v644 = vpop.permute.xlu0 %643
        %645 = vrot.lane.b32.xlu0 %v339, 4
        %v646 = vpop.permute.xlu0 %645
        %647 = vrot.lane.b32.xlu0 %v340, 4
        %v648 = vpop.permute.xlu0 %647
        %649 = vrot.lane.b32.xlu0 %v341, 4
        %v650 = vpop.permute.xlu0 %649
        %651 = vrot.lane.b32.xlu0 %v342, 4
        %v652 = vpop.permute.xlu0 %651
        %653 = vrot.lane.b32.xlu0 %v343, 4
        %v654 = vpop.permute.xlu0 %653
        %655 = vrot.lane.b32.xlu0 %v344, 4
        %v656 = vpop.permute.xlu0 %655
        %657 = vrot.lane.b32.xlu0 %v345, 4
        %v658 = vpop.permute.xlu0 %657
        %659 = vrot.lane.b32.xlu0 %v346, 4
        %v660 = vpop.permute.xlu0 %659
        %661 = vrot.lane.b32.xlu0 %v347, 4
        %v662 = vpop.permute.xlu0 %661
        %663 = vrot.lane.b32.xlu0 %v348, 4
        %v664 = vpop.permute.xlu0 %663
        %665 = vrot.lane.b32.xlu0 %v349, 4
        %v666 = vpop.permute.xlu0 %665
        %667 = vrot.lane.b32.xlu0 %v350, 4
        %v668 = vpop.permute.xlu0 %667
        %669 = vrot.lane.b32.xlu0 %v351, 4
        %v670 = vpop.permute.xlu0 %669
        %671 = vrot.lane.b32.xlu0 %v352, 4
        %v672 = vpop.permute.xlu0 %671
        %673 = vrot.lane.b32.xlu0 %v353, 4
        %v674 = vpop.permute.xlu0 %673
        %739 = vrot.lane.b32.xlu0 %v354, 8
        %v740 = vpop.permute.xlu0 %739
        %741 = vrot.lane.b32.xlu0 %v355, 8
        %v742 = vpop.permute.xlu0 %741
        %743 = vrot.lane.b32.xlu0 %v356, 8
        %v744 = vpop.permute.xlu0 %743
        %745 = vrot.lane.b32.xlu0 %v357, 8
        %v746 = vpop.permute.xlu0 %745
        %747 = vrot.lane.b32.xlu0 %v358, 8
        %v748 = vpop.permute.xlu0 %747
        %749 = vrot.lane.b32.xlu0 %v359, 8
        %v750 = vpop.permute.xlu0 %749
        %751 = vrot.lane.b32.xlu0 %v360, 8
        %v752 = vpop.permute.xlu0 %751
        %753 = vrot.lane.b32.xlu0 %v361, 8
        %v754 = vpop.permute.xlu0 %753
        %755 = vrot.lane.b32.xlu0 %v362, 8
        %v756 = vpop.permute.xlu0 %755
        %757 = vrot.lane.b32.xlu0 %v363, 8
        %v758 = vpop.permute.xlu0 %757
        %759 = vrot.lane.b32.xlu0 %v364, 8
        %v760 = vpop.permute.xlu0 %759
        %761 = vrot.lane.b32.xlu0 %v365, 8
        %v762 = vpop.permute.xlu0 %761
        %763 = vrot.lane.b32.xlu0 %v366, 8
        %v764 = vpop.permute.xlu0 %763
        %765 = vrot.lane.b32.xlu0 %v367, 8
        %v766 = vpop.permute.xlu0 %765
        %767 = vrot.lane.b32.xlu0 %v368, 8
        %v768 = vpop.permute.xlu0 %767
        %769 = vrot.lane.b32.xlu0 %v369, 8
        %v770 = vpop.permute.xlu0 %769
        %771 = vrot.lane.b32.xlu0 %v370, 8
        %v772 = vpop.permute.xlu0 %771
        %773 = vrot.lane.b32.xlu0 %v371, 8
        %v774 = vpop.permute.xlu0 %773
        %775 = vrot.lane.b32.xlu0 %v372, 8
        %v776 = vpop.permute.xlu0 %775
        %777 = vrot.lane.b32.xlu0 %v373, 8
        %v778 = vpop.permute.xlu0 %777
        %779 = vrot.lane.b32.xlu0 %v374, 8
        %v780 = vpop.permute.xlu0 %779
        %781 = vrot.lane.b32.xlu0 %v375, 8
        %v782 = vpop.permute.xlu0 %781
        %783 = vrot.lane.b32.xlu0 %v376, 8
        %v784 = vpop.permute.xlu0 %783
        %785 = vrot.lane.b32.xlu0 %v377, 8
        %v786 = vpop.permute.xlu0 %785
        %787 = vrot.lane.b32.xlu0 %v378, 8
        %v788 = vpop.permute.xlu0 %787
        %789 = vrot.lane.b32.xlu0 %v379, 8
        %v790 = vpop.permute.xlu0 %789
        %791 = vrot.lane.b32.xlu0 %v380, 8
        %v792 = vpop.permute.xlu0 %791
        %793 = vrot.lane.b32.xlu0 %v381, 8
        %v794 = vpop.permute.xlu0 %793
        %795 = vrot.lane.b32.xlu0 %v382, 8
        %v796 = vpop.permute.xlu0 %795
        %797 = vrot.lane.b32.xlu0 %v383, 8
        %v798 = vpop.permute.xlu0 %797
        %799 = vrot.lane.b32.xlu0 %v384, 8
        %v800 = vpop.permute.xlu0 %799
        %801 = vrot.lane.b32.xlu0 %v385, 8
        %v802 = vpop.permute.xlu0 %801
        %867 = vrot.lane.b32.xlu0 %v386, 12
        %v868 = vpop.permute.xlu0 %867
        %869 = vrot.lane.b32.xlu0 %v387, 12
        %v870 = vpop.permute.xlu0 %869
        %871 = vrot.lane.b32.xlu0 %v388, 12
        %v872 = vpop.permute.xlu0 %871
        %873 = vrot.lane.b32.xlu0 %v389, 12
        %v874 = vpop.permute.xlu0 %873
        %875 = vrot.lane.b32.xlu0 %v390, 12
        %v876 = vpop.permute.xlu0 %875
        %877 = vrot.lane.b32.xlu0 %v391, 12
        %v878 = vpop.permute.xlu0 %877
        %879 = vrot.lane.b32.xlu0 %v392, 12
        %v880 = vpop.permute.xlu0 %879
        %881 = vrot.lane.b32.xlu0 %v393, 12
        %v882 = vpop.permute.xlu0 %881
        %883 = vrot.lane.b32.xlu0 %v394, 12
        %v884 = vpop.permute.xlu0 %883
        %885 = vrot.lane.b32.xlu0 %v395, 12
        %v886 = vpop.permute.xlu0 %885
        %887 = vrot.lane.b32.xlu0 %v396, 12
        %v888 = vpop.permute.xlu0 %887
        %889 = vrot.lane.b32.xlu0 %v397, 12
        %v890 = vpop.permute.xlu0 %889
        %891 = vrot.lane.b32.xlu0 %v398, 12
        %v892 = vpop.permute.xlu0 %891
        %893 = vrot.lane.b32.xlu0 %v399, 12
        %v894 = vpop.permute.xlu0 %893
        %895 = vrot.lane.b32.xlu0 %v400, 12
        %v896 = vpop.permute.xlu0 %895
        %897 = vrot.lane.b32.xlu0 %v401, 12
        %v898 = vpop.permute.xlu0 %897
        %899 = vrot.lane.b32.xlu0 %v402, 12
        %v900 = vpop.permute.xlu0 %899
        %901 = vrot.lane.b32.xlu0 %v403, 12
        %v902 = vpop.permute.xlu0 %901
        %903 = vrot.lane.b32.xlu0 %v404, 12
        %v904 = vpop.permute.xlu0 %903
        %905 = vrot.lane.b32.xlu0 %v405, 12
        %v906 = vpop.permute.xlu0 %905
        %907 = vrot.lane.b32.xlu0 %v406, 12
        %v908 = vpop.permute.xlu0 %907
        %909 = vrot.lane.b32.xlu0 %v407, 12
        %v910 = vpop.permute.xlu0 %909
        %911 = vrot.lane.b32.xlu0 %v408, 12
        %v912 = vpop.permute.xlu0 %911
        %913 = vrot.lane.b32.xlu0 %v409, 12
        %v914 = vpop.permute.xlu0 %913
        %915 = vrot.lane.b32.xlu0 %v410, 12
        %v916 = vpop.permute.xlu0 %915
        %917 = vrot.lane.b32.xlu0 %v411, 12
        %v918 = vpop.permute.xlu0 %917
        %919 = vrot.lane.b32.xlu0 %v412, 12
        %v920 = vpop.permute.xlu0 %919
        %921 = vrot.lane.b32.xlu0 %v413, 12
        %v922 = vpop.permute.xlu0 %921
        %923 = vrot.lane.b32.xlu0 %v414, 12
        %v924 = vpop.permute.xlu0 %923
        %925 = vrot.lane.b32.xlu0 %v415, 12
        %v926 = vpop.permute.xlu0 %925
        %927 = vrot.lane.b32.xlu0 %v416, 12
        %v928 = vpop.permute.xlu0 %927
        %929 = vrot.lane.b32.xlu0 %v417, 12
        %v930 = vpop.permute.xlu0 %929
        %995 = vrot.lane.b32.xlu0 %v418, 16
        %v996 = vpop.permute.xlu0 %995
        %997 = vrot.lane.b32.xlu0 %v419, 16
        %v998 = vpop.permute.xlu0 %997
        %999 = vrot.lane.b32.xlu0 %v420, 16
        %v1000 = vpop.permute.xlu0 %999
        %1001 = vrot.lane.b32.xlu0 %v421, 16
        %v1002 = vpop.permute.xlu0 %1001
        %1003 = vrot.lane.b32.xlu0 %v422, 16
        %v1004 = vpop.permute.xlu0 %1003
        %1005 = vrot.lane.b32.xlu0 %v423, 16
        %v1006 = vpop.permute.xlu0 %1005
        %1007 = vrot.lane.b32.xlu0 %v424, 16
        %v1008 = vpop.permute.xlu0 %1007
        %1009 = vrot.lane.b32.xlu0 %v425, 16
        %v1010 = vpop.permute.xlu0 %1009
        %1011 = vrot.lane.b32.xlu0 %v426, 16
        %v1012 = vpop.permute.xlu0 %1011
        %1013 = vrot.lane.b32.xlu0 %v427, 16
        %v1014 = vpop.permute.xlu0 %1013
        %1015 = vrot.lane.b32.xlu0 %v428, 16
        %v1016 = vpop.permute.xlu0 %1015
        %1017 = vrot.lane.b32.xlu0 %v429, 16
        %v1018 = vpop.permute.xlu0 %1017
        %1019 = vrot.lane.b32.xlu0 %v430, 16
        %v1020 = vpop.permute.xlu0 %1019
        %1021 = vrot.lane.b32.xlu0 %v431, 16
        %v1022 = vpop.permute.xlu0 %1021
        %1023 = vrot.lane.b32.xlu0 %v432, 16
        %v1024 = vpop.permute.xlu0 %1023
        %1025 = vrot.lane.b32.xlu0 %v433, 16
        %v1026 = vpop.permute.xlu0 %1025
        %1027 = vrot.lane.b32.xlu0 %v434, 16
        %v1028 = vpop.permute.xlu0 %1027
        %1029 = vrot.lane.b32.xlu0 %v435, 16
        %v1030 = vpop.permute.xlu0 %1029
        %1031 = vrot.lane.b32.xlu0 %v436, 16
        %v1032 = vpop.permute.xlu0 %1031
        %1033 = vrot.lane.b32.xlu0 %v437, 16
        %v1034 = vpop.permute.xlu0 %1033
        %1035 = vrot.lane.b32.xlu0 %v438, 16
        %v1036 = vpop.permute.xlu0 %1035
        %1037 = vrot.lane.b32.xlu0 %v439, 16
        %v1038 = vpop.permute.xlu0 %1037
        %1039 = vrot.lane.b32.xlu0 %v440, 16
        %v1040 = vpop.permute.xlu0 %1039
        %1041 = vrot.lane.b32.xlu0 %v441, 16
        %v1042 = vpop.permute.xlu0 %1041
        %1043 = vrot.lane.b32.xlu0 %v442, 16
        %v1044 = vpop.permute.xlu0 %1043
        %1045 = vrot.lane.b32.xlu0 %v443, 16
        %v1046 = vpop.permute.xlu0 %1045
        %1047 = vrot.lane.b32.xlu0 %v444, 16
        %v1048 = vpop.permute.xlu0 %1047
        %1049 = vrot.lane.b32.xlu0 %v445, 16
        %v1050 = vpop.permute.xlu0 %1049
        %1051 = vrot.lane.b32.xlu0 %v446, 16
        %v1052 = vpop.permute.xlu0 %1051
        %1053 = vrot.lane.b32.xlu0 %v447, 16
        %v1054 = vpop.permute.xlu0 %1053
        %1055 = vrot.lane.b32.xlu0 %v448, 16
        %v1056 = vpop.permute.xlu0 %1055
        %1057 = vrot.lane.b32.xlu0 %v449, 16
        %v1058 = vpop.permute.xlu0 %1057
        %1123 = vrot.lane.b32.xlu0 %v450, 20
        %v1124 = vpop.permute.xlu0 %1123
        %1125 = vrot.lane.b32.xlu0 %v451, 20
        %v1126 = vpop.permute.xlu0 %1125
        %1127 = vrot.lane.b32.xlu0 %v452, 20
        %v1128 = vpop.permute.xlu0 %1127
        %1129 = vrot.lane.b32.xlu0 %v453, 20
        %v1130 = vpop.permute.xlu0 %1129
        %1131 = vrot.lane.b32.xlu0 %v454, 20
        %v1132 = vpop.permute.xlu0 %1131
        %1133 = vrot.lane.b32.xlu0 %v455, 20
        %v1134 = vpop.permute.xlu0 %1133
        %1135 = vrot.lane.b32.xlu0 %v456, 20
        %v1136 = vpop.permute.xlu0 %1135
        %1137 = vrot.lane.b32.xlu0 %v457, 20
        %v1138 = vpop.permute.xlu0 %1137
        %1139 = vrot.lane.b32.xlu0 %v458, 20
        %v1140 = vpop.permute.xlu0 %1139
        %1141 = vrot.lane.b32.xlu0 %v459, 20
        %v1142 = vpop.permute.xlu0 %1141
        %1143 = vrot.lane.b32.xlu0 %v460, 20
        %v1144 = vpop.permute.xlu0 %1143
        %1145 = vrot.lane.b32.xlu0 %v461, 20
        %v1146 = vpop.permute.xlu0 %1145
        %1147 = vrot.lane.b32.xlu0 %v462, 20
        %v1148 = vpop.permute.xlu0 %1147
        %1149 = vrot.lane.b32.xlu0 %v463, 20
        %v1150 = vpop.permute.xlu0 %1149
        %1151 = vrot.lane.b32.xlu0 %v464, 20
        %v1152 = vpop.permute.xlu0 %1151
        %1153 = vrot.lane.b32.xlu0 %v465, 20
        %v1154 = vpop.permute.xlu0 %1153
        %1155 = vrot.lane.b32.xlu0 %v466, 20
        %v1156 = vpop.permute.xlu0 %1155
        %1157 = vrot.lane.b32.xlu0 %v467, 20
        %v1158 = vpop.permute.xlu0 %1157
        %1159 = vrot.lane.b32.xlu0 %v468, 20
        %v1160 = vpop.permute.xlu0 %1159
        %1161 = vrot.lane.b32.xlu0 %v469, 20
        %v1162 = vpop.permute.xlu0 %1161
        %1163 = vrot.lane.b32.xlu0 %v470, 20
        %v1164 = vpop.permute.xlu0 %1163
        %1165 = vrot.lane.b32.xlu0 %v471, 20
        %v1166 = vpop.permute.xlu0 %1165
        %1167 = vrot.lane.b32.xlu0 %v472, 20
        %v1168 = vpop.permute.xlu0 %1167
        %1169 = vrot.lane.b32.xlu0 %v473, 20
        %v1170 = vpop.permute.xlu0 %1169
        %1171 = vrot.lane.b32.xlu0 %v474, 20
        %v1172 = vpop.permute.xlu0 %1171
        %1173 = vrot.lane.b32.xlu0 %v475, 20
        %v1174 = vpop.permute.xlu0 %1173
        %1175 = vrot.lane.b32.xlu0 %v476, 20
        %v1176 = vpop.permute.xlu0 %1175
        %1177 = vrot.lane.b32.xlu0 %v477, 20
        %v1178 = vpop.permute.xlu0 %1177
        %1179 = vrot.lane.b32.xlu0 %v478, 20
        %v1180 = vpop.permute.xlu0 %1179
        %1181 = vrot.lane.b32.xlu0 %v479, 20
        %v1182 = vpop.permute.xlu0 %1181
        %1183 = vrot.lane.b32.xlu0 %v480, 20
        %v1184 = vpop.permute.xlu0 %1183
        %1185 = vrot.lane.b32.xlu0 %v481, 20
        %v1186 = vpop.permute.xlu0 %1185
        %1251 = vrot.lane.b32.xlu0 %v483, 24
        %v1252 = vpop.permute.xlu0 %1251
        %1253 = vrot.lane.b32.xlu0 %v484, 24
        %v1254 = vpop.permute.xlu0 %1253
        %1255 = vrot.lane.b32.xlu0 %v485, 24
        %v1256 = vpop.permute.xlu0 %1255
        %1257 = vrot.lane.b32.xlu0 %v486, 24
        %v1258 = vpop.permute.xlu0 %1257
        %1259 = vrot.lane.b32.xlu0 %v487, 24
        %v1260 = vpop.permute.xlu0 %1259
        %1261 = vrot.lane.b32.xlu0 %v488, 24
        %v1262 = vpop.permute.xlu0 %1261
        %1263 = vrot.lane.b32.xlu0 %v489, 24
        %v1264 = vpop.permute.xlu0 %1263
        %1265 = vrot.lane.b32.xlu0 %v490, 24
        %v1266 = vpop.permute.xlu0 %1265
        %1267 = vrot.lane.b32.xlu0 %v491, 24
        %v1268 = vpop.permute.xlu0 %1267
        %1269 = vrot.lane.b32.xlu0 %v492, 24
        %v1270 = vpop.permute.xlu0 %1269
        %1271 = vrot.lane.b32.xlu0 %v493, 24
        %v1272 = vpop.permute.xlu0 %1271
        %1273 = vrot.lane.b32.xlu0 %v494, 24
        %v1274 = vpop.permute.xlu0 %1273
        %1275 = vrot.lane.b32.xlu0 %v495, 24
        %v1276 = vpop.permute.xlu0 %1275
        %1277 = vrot.lane.b32.xlu0 %v496, 24
        %v1278 = vpop.permute.xlu0 %1277
        %1279 = vrot.lane.b32.xlu0 %v497, 24
        %v1280 = vpop.permute.xlu0 %1279
        %1281 = vrot.lane.b32.xlu0 %v498, 24
        %v1282 = vpop.permute.xlu0 %1281
        %1283 = vrot.lane.b32.xlu0 %v499, 24
        %v1284 = vpop.permute.xlu0 %1283
        %1285 = vrot.lane.b32.xlu0 %v500, 24
        %v1286 = vpop.permute.xlu0 %1285
        %1287 = vrot.lane.b32.xlu0 %v501, 24
        %v1288 = vpop.permute.xlu0 %1287
        %1289 = vrot.lane.b32.xlu0 %v502, 24
        %v1290 = vpop.permute.xlu0 %1289
        %1291 = vrot.lane.b32.xlu0 %v503, 24
        %v1292 = vpop.permute.xlu0 %1291
        %1293 = vrot.lane.b32.xlu0 %v504, 24
        %v1294 = vpop.permute.xlu0 %1293
        %1295 = vrot.lane.b32.xlu0 %v505, 24
        %v1296 = vpop.permute.xlu0 %1295
        %1297 = vrot.lane.b32.xlu0 %v506, 24
        %v1298 = vpop.permute.xlu0 %1297
        %1299 = vrot.lane.b32.xlu0 %v507, 24
        %v1300 = vpop.permute.xlu0 %1299
        %1301 = vrot.lane.b32.xlu0 %v508, 24
        %v1302 = vpop.permute.xlu0 %1301
        %1303 = vrot.lane.b32.xlu0 %v509, 24
        %v1304 = vpop.permute.xlu0 %1303
        %1305 = vrot.lane.b32.xlu0 %v510, 24
        %v1306 = vpop.permute.xlu0 %1305
        %1307 = vrot.lane.b32.xlu0 %v511, 24
        %v1308 = vpop.permute.xlu0 %1307
        %1309 = vrot.lane.b32.xlu0 %v512, 24
        %v1310 = vpop.permute.xlu0 %1309
        %1311 = vrot.lane.b32.xlu0 %v513, 24
        %v1312 = vpop.permute.xlu0 %1311
        %1313 = vrot.lane.b32.xlu0 %v514, 24
        %v1314 = vpop.permute.xlu0 %1313
        %1379 = vrot.lane.b32.xlu0 %v515, 28
        %v1380 = vpop.permute.xlu0 %1379
        %1381 = vrot.lane.b32.xlu0 %v516, 28
        %v1382 = vpop.permute.xlu0 %1381
        %1383 = vrot.lane.b32.xlu0 %v517, 28
        %v1384 = vpop.permute.xlu0 %1383
        %1385 = vrot.lane.b32.xlu0 %v518, 28
        %v1386 = vpop.permute.xlu0 %1385
        %1387 = vrot.lane.b32.xlu0 %v519, 28
        %v1388 = vpop.permute.xlu0 %1387
        %1389 = vrot.lane.b32.xlu0 %v520, 28
        %v1390 = vpop.permute.xlu0 %1389
        %1391 = vrot.lane.b32.xlu0 %v521, 28
        %v1392 = vpop.permute.xlu0 %1391
        %1393 = vrot.lane.b32.xlu0 %v522, 28
        %v1394 = vpop.permute.xlu0 %1393
        %1395 = vrot.lane.b32.xlu0 %v523, 28
        %v1396 = vpop.permute.xlu0 %1395
        %1397 = vrot.lane.b32.xlu0 %v524, 28
        %v1398 = vpop.permute.xlu0 %1397
        %1399 = vrot.lane.b32.xlu0 %v525, 28
        %v1400 = vpop.permute.xlu0 %1399
        %1401 = vrot.lane.b32.xlu0 %v526, 28
        %v1402 = vpop.permute.xlu0 %1401
        %1403 = vrot.lane.b32.xlu0 %v527, 28
        %v1404 = vpop.permute.xlu0 %1403
        %1405 = vrot.lane.b32.xlu0 %v528, 28
        %v1406 = vpop.permute.xlu0 %1405
        %1407 = vrot.lane.b32.xlu0 %v529, 28
        %v1408 = vpop.permute.xlu0 %1407
        %1409 = vrot.lane.b32.xlu0 %v530, 28
        %v1410 = vpop.permute.xlu0 %1409
        %1411 = vrot.lane.b32.xlu0 %v531, 28
        %v1412 = vpop.permute.xlu0 %1411
        %1413 = vrot.lane.b32.xlu0 %v532, 28
        %v1414 = vpop.permute.xlu0 %1413
        %1415 = vrot.lane.b32.xlu0 %v533, 28
        %v1416 = vpop.permute.xlu0 %1415
        %1417 = vrot.lane.b32.xlu0 %v534, 28
        %v1418 = vpop.permute.xlu0 %1417
        %1419 = vrot.lane.b32.xlu0 %v535, 28
        %v1420 = vpop.permute.xlu0 %1419
        %1421 = vrot.lane.b32.xlu0 %v536, 28
        %v1422 = vpop.permute.xlu0 %1421
        %1423 = vrot.lane.b32.xlu0 %v537, 28
        %v1424 = vpop.permute.xlu0 %1423
        %1425 = vrot.lane.b32.xlu0 %v538, 28
        %v1426 = vpop.permute.xlu0 %1425
        %1427 = vrot.lane.b32.xlu0 %v539, 28
        %v1428 = vpop.permute.xlu0 %1427
        %1429 = vrot.lane.b32.xlu0 %v540, 28
        %v1430 = vpop.permute.xlu0 %1429
        %1431 = vrot.lane.b32.xlu0 %v541, 28
        %v1432 = vpop.permute.xlu0 %1431
        %1433 = vrot.lane.b32.xlu0 %v542, 28
        %v1434 = vpop.permute.xlu0 %1433
        %1435 = vrot.lane.b32.xlu0 %v543, 28
        %v1436 = vpop.permute.xlu0 %1435
        %1437 = vrot.lane.b32.xlu0 %v544, 28
        %v1438 = vpop.permute.xlu0 %1437
        %1439 = vrot.lane.b32.xlu0 %v545, 28
        %v1440 = vpop.permute.xlu0 %1439
        %1441 = vrot.lane.b32.xlu0 %v546, 28
        %v1442 = vpop.permute.xlu0 %1441
        %1507 = vrot.lane.b32.xlu0 %v547, 32
        %v1508 = vpop.permute.xlu0 %1507
        %1509 = vrot.lane.b32.xlu0 %v548, 32
        %v1510 = vpop.permute.xlu0 %1509
        %1511 = vrot.lane.b32.xlu0 %v549, 32
        %v1512 = vpop.permute.xlu0 %1511
        %1513 = vrot.lane.b32.xlu0 %v550, 32
        %v1514 = vpop.permute.xlu0 %1513
        %1515 = vrot.lane.b32.xlu0 %v551, 32
        %v1516 = vpop.permute.xlu0 %1515
        %1517 = vrot.lane.b32.xlu0 %v552, 32
        %v1518 = vpop.permute.xlu0 %1517
        %1519 = vrot.lane.b32.xlu0 %v553, 32
        %v1520 = vpop.permute.xlu0 %1519
        %1521 = vrot.lane.b32.xlu0 %v554, 32
        %v1522 = vpop.permute.xlu0 %1521
        %1523 = vrot.lane.b32.xlu0 %v555, 32
        %v1524 = vpop.permute.xlu0 %1523
        %1525 = vrot.lane.b32.xlu0 %v556, 32
        %v1526 = vpop.permute.xlu0 %1525
        %1527 = vrot.lane.b32.xlu0 %v557, 32
        %v1528 = vpop.permute.xlu0 %1527
        %1529 = vrot.lane.b32.xlu0 %v558, 32
        %v1530 = vpop.permute.xlu0 %1529
        %1531 = vrot.lane.b32.xlu0 %v559, 32
        %v1532 = vpop.permute.xlu0 %1531
        %1533 = vrot.lane.b32.xlu0 %v560, 32
        %v1534 = vpop.permute.xlu0 %1533
        %1535 = vrot.lane.b32.xlu0 %v561, 32
        %v1536 = vpop.permute.xlu0 %1535
        %1537 = vrot.lane.b32.xlu0 %v562, 32
        %v1538 = vpop.permute.xlu0 %1537
        %1539 = vrot.lane.b32.xlu0 %v563, 32
        %v1540 = vpop.permute.xlu0 %1539
        %1541 = vrot.lane.b32.xlu0 %v564, 32
        %v1542 = vpop.permute.xlu0 %1541
        %1543 = vrot.lane.b32.xlu0 %v565, 32
        %v1544 = vpop.permute.xlu0 %1543
        %1545 = vrot.lane.b32.xlu0 %v566, 32
        %v1546 = vpop.permute.xlu0 %1545
        %1547 = vrot.lane.b32.xlu0 %v567, 32
        %v1548 = vpop.permute.xlu0 %1547
        %1549 = vrot.lane.b32.xlu0 %v568, 32
        %v1550 = vpop.permute.xlu0 %1549
        %1551 = vrot.lane.b32.xlu0 %v569, 32
        %v1552 = vpop.permute.xlu0 %1551
        %1553 = vrot.lane.b32.xlu0 %v570, 32
        %v1554 = vpop.permute.xlu0 %1553
        %1555 = vrot.lane.b32.xlu0 %v571, 32
        %v1556 = vpop.permute.xlu0 %1555
        %1557 = vrot.lane.b32.xlu0 %v572, 32
        %v1558 = vpop.permute.xlu0 %1557
        %1559 = vrot.lane.b32.xlu0 %v573, 32
        %v1560 = vpop.permute.xlu0 %1559
        %1561 = vrot.lane.b32.xlu0 %v574, 32
        %v1562 = vpop.permute.xlu0 %1561
        %1563 = vrot.lane.b32.xlu0 %v575, 32
        %v1564 = vpop.permute.xlu0 %1563
        %1565 = vrot.lane.b32.xlu0 %v576, 32
        %v1566 = vpop.permute.xlu0 %1565
        %1567 = vrot.lane.b32.xlu0 %v577, 32
        %v1568 = vpop.permute.xlu0 %1567
        %1569 = vrot.lane.b32.xlu0 %v578, 32
        %v1570 = vpop.permute.xlu0 %1569
        %v1603 = vsel %vm169, %v290, %v612
        %v1604 = vsel %vm169, %v291, %v614
        %v1605 = vsel %vm169, %v292, %v616
        %v1606 = vsel %vm169, %v293, %v618
        %v1607 = vsel %vm169, %v294, %v620
        %v1608 = vsel %vm169, %v295, %v622
        %v1609 = vsel %vm169, %v296, %v624
        %v1610 = vsel %vm169, %v297, %v626
        %v1611 = vsel %vm169, %v298, %v628
        %v1612 = vsel %vm169, %v299, %v630
        %v1613 = vsel %vm169, %v300, %v632
        %v1614 = vsel %vm169, %v301, %v634
        %v1615 = vsel %vm169, %v302, %v636
        %v1616 = vsel %vm169, %v303, %v638
        %v1617 = vsel %vm169, %v304, %v640
        %v1618 = vsel %vm169, %v305, %v642
        %v1619 = vsel %vm169, %v306, %v644
        %v1620 = vsel %vm169, %v307, %v646
        %v1621 = vsel %vm169, %v308, %v648
        %v1622 = vsel %vm169, %v309, %v650
        %v1623 = vsel %vm169, %v310, %v652
        %v1624 = vsel %vm169, %v311, %v654
        %v1625 = vsel %vm169, %v312, %v656
        %v1626 = vsel %vm169, %v313, %v658
        %v1627 = vsel %vm169, %v314, %v660
        %v1628 = vsel %vm169, %v315, %v662
        %v1629 = vsel %vm169, %v316, %v664
        %v1630 = vsel %vm169, %v317, %v666
        %v1631 = vsel %vm169, %v318, %v668
        %v1632 = vsel %vm169, %v319, %v670
        %v1633 = vsel %vm169, %v320, %v672
        %v1634 = vsel %vm169, %v321, %v674
        %vm1635 = vcmask 64512
        %v1636 = vsel %vm1635, %v1603, %v740
        %v1637 = vsel %vm1635, %v1604, %v742
        %v1638 = vsel %vm1635, %v1605, %v744
        %v1639 = vsel %vm1635, %v1606, %v746
        %v1640 = vsel %vm1635, %v1607, %v748
        %v1641 = vsel %vm1635, %v1608, %v750
        %v1642 = vsel %vm1635, %v1609, %v752
        %v1643 = vsel %vm1635, %v1610, %v754
        %v1644 = vsel %vm1635, %v1611, %v756
        %v1645 = vsel %vm1635, %v1612, %v758
        %v1646 = vsel %vm1635, %v1613, %v760
        %v1647 = vsel %vm1635, %v1614, %v762
        %v1648 = vsel %vm1635, %v1615, %v764
        %v1649 = vsel %vm1635, %v1616, %v766
        %v1650 = vsel %vm1635, %v1617, %v768
        %v1651 = vsel %vm1635, %v1618, %v770
        %v1652 = vsel %vm1635, %v1619, %v772
        %v1653 = vsel %vm1635, %v1620, %v774
        %v1654 = vsel %vm1635, %v1621, %v776
        %v1655 = vsel %vm1635, %v1622, %v778
        %v1656 = vsel %vm1635, %v1623, %v780
        %v1657 = vsel %vm1635, %v1624, %v782
        %v1658 = vsel %vm1635, %v1625, %v784
        %v1659 = vsel %vm1635, %v1626, %v786
        %v1660 = vsel %vm1635, %v1627, %v788
        %v1661 = vsel %vm1635, %v1628, %v790
        %v1662 = vsel %vm1635, %v1629, %v792
        %v1663 = vsel %vm1635, %v1630, %v794
        %v1664 = vsel %vm1635, %v1631, %v796
        %v1665 = vsel %vm1635, %v1632, %v798
        %v1666 = vsel %vm1635, %v1633, %v800
        %v1667 = vsel %vm1635, %v1634, %v802
        %vm1668 = vcmask 97280
        %v1669 = vsel %vm1668, %v1636, %v868
        %v1670 = vsel %vm1668, %v1637, %v870
        %v1671 = vsel %vm1668, %v1638, %v872
        %v1672 = vsel %vm1668, %v1639, %v874
        %v1673 = vsel %vm1668, %v1640, %v876
        %v1674 = vsel %vm1668, %v1641, %v878
        %v1675 = vsel %vm1668, %v1642, %v880
        %v1676 = vsel %vm1668, %v1643, %v882
        %v1677 = vsel %vm1668, %v1644, %v884
        %v1678 = vsel %vm1668, %v1645, %v886
        %v1679 = vsel %vm1668, %v1646, %v888
        %v1680 = vsel %vm1668, %v1647, %v890
        %v1681 = vsel %vm1668, %v1648, %v892
        %v1682 = vsel %vm1668, %v1649, %v894
        %v1683 = vsel %vm1668, %v1650, %v896
        %v1684 = vsel %vm1668, %v1651, %v898
        %v1685 = vsel %vm1668, %v1652, %v900
        %v1686 = vsel %vm1668, %v1653, %v902
        %v1687 = vsel %vm1668, %v1654, %v904
        %v1688 = vsel %vm1668, %v1655, %v906
        %v1689 = vsel %vm1668, %v1656, %v908
        %v1690 = vsel %vm1668, %v1657, %v910
        %v1691 = vsel %vm1668, %v1658, %v912
        %v1692 = vsel %vm1668, %v1659, %v914
        %v1693 = vsel %vm1668, %v1660, %v916
        %v1694 = vsel %vm1668, %v1661, %v918
        %v1695 = vsel %vm1668, %v1662, %v920
        %v1696 = vsel %vm1668, %v1663, %v922
        %v1697 = vsel %vm1668, %v1664, %v924
        %v1698 = vsel %vm1668, %v1665, %v926
        %v1699 = vsel %vm1668, %v1666, %v928
        %v1700 = vsel %vm1668, %v1667, %v930
        %vm1701 = vcmask 130048
        %v1702 = vsel %vm1701, %v1669, %v996
        %v1703 = vsel %vm1701, %v1670, %v998
        %v1704 = vsel %vm1701, %v1671, %v1000
        %v1705 = vsel %vm1701, %v1672, %v1002
        %v1706 = vsel %vm1701, %v1673, %v1004
        %v1707 = vsel %vm1701, %v1674, %v1006
        %v1708 = vsel %vm1701, %v1675, %v1008
        %v1709 = vsel %vm1701, %v1676, %v1010
        %v1710 = vsel %vm1701, %v1677, %v1012
        %v1711 = vsel %vm1701, %v1678, %v1014
        %v1712 = vsel %vm1701, %v1679, %v1016
        %v1713 = vsel %vm1701, %v1680, %v1018
        %v1714 = vsel %vm1701, %v1681, %v1020
        %v1715 = vsel %vm1701, %v1682, %v1022
        %v1716 = vsel %vm1701, %v1683, %v1024
        %v1717 = vsel %vm1701, %v1684, %v1026
        %v1718 = vsel %vm1701, %v1685, %v1028
        %v1719 = vsel %vm1701, %v1686, %v1030
        %v1720 = vsel %vm1701, %v1687, %v1032
        %v1721 = vsel %vm1701, %v1688, %v1034
        %v1722 = vsel %vm1701, %v1689, %v1036
        %v1723 = vsel %vm1701, %v1690, %v1038
        %v1724 = vsel %vm1701, %v1691, %v1040
        %v1725 = vsel %vm1701, %v1692, %v1042
        %v1726 = vsel %vm1701, %v1693, %v1044
        %v1727 = vsel %vm1701, %v1694, %v1046
        %v1728 = vsel %vm1701, %v1695, %v1048
        %v1729 = vsel %vm1701, %v1696, %v1050
        %v1730 = vsel %vm1701, %v1697, %v1052
        %v1731 = vsel %vm1701, %v1698, %v1054
        %v1732 = vsel %vm1701, %v1699, %v1056
        %v1733 = vsel %vm1701, %v1700, %v1058
        %vm1734 = vcmask 162816
        %v1735 = vsel %vm1734, %v1702, %v1124
        %v1736 = vsel %vm1734, %v1703, %v1126
        %v1737 = vsel %vm1734, %v1704, %v1128
        %v1738 = vsel %vm1734, %v1705, %v1130
        %v1739 = vsel %vm1734, %v1706, %v1132
        %v1740 = vsel %vm1734, %v1707, %v1134
        %v1741 = vsel %vm1734, %v1708, %v1136
        %v1742 = vsel %vm1734, %v1709, %v1138
        %v1743 = vsel %vm1734, %v1710, %v1140
        %v1744 = vsel %vm1734, %v1711, %v1142
        %v1745 = vsel %vm1734, %v1712, %v1144
        %v1746 = vsel %vm1734, %v1713, %v1146
        %v1747 = vsel %vm1734, %v1714, %v1148
        %v1748 = vsel %vm1734, %v1715, %v1150
        %v1749 = vsel %vm1734, %v1716, %v1152
        %v1750 = vsel %vm1734, %v1717, %v1154
        %v1751 = vsel %vm1734, %v1718, %v1156
        %v1752 = vsel %vm1734, %v1719, %v1158
        %v1753 = vsel %vm1734, %v1720, %v1160
        %v1754 = vsel %vm1734, %v1721, %v1162
        %v1755 = vsel %vm1734, %v1722, %v1164
        %v1756 = vsel %vm1734, %v1723, %v1166
        %v1757 = vsel %vm1734, %v1724, %v1168
        %v1758 = vsel %vm1734, %v1725, %v1170
        %v1759 = vsel %vm1734, %v1726, %v1172
        %v1760 = vsel %vm1734, %v1727, %v1174
        %v1761 = vsel %vm1734, %v1728, %v1176
        %v1762 = vsel %vm1734, %v1729, %v1178
        %v1763 = vsel %vm1734, %v1730, %v1180
        %v1764 = vsel %vm1734, %v1731, %v1182
        %v1765 = vsel %vm1734, %v1732, %v1184
        %v1766 = vsel %vm1734, %v1733, %v1186
        %vm1767 = vcmask 195584
        %v1768 = vsel %vm1767, %v1735, %v1252
        %v1769 = vsel %vm1767, %v1736, %v1254
        %v1770 = vsel %vm1767, %v1737, %v1256
        %v1771 = vsel %vm1767, %v1738, %v1258
        %v1772 = vsel %vm1767, %v1739, %v1260
        %v1773 = vsel %vm1767, %v1740, %v1262
        %v1774 = vsel %vm1767, %v1741, %v1264
        %v1775 = vsel %vm1767, %v1742, %v1266
        %v1776 = vsel %vm1767, %v1743, %v1268
        %v1777 = vsel %vm1767, %v1744, %v1270
        %v1778 = vsel %vm1767, %v1745, %v1272
        %v1779 = vsel %vm1767, %v1746, %v1274
        %v1780 = vsel %vm1767, %v1747, %v1276
        %v1781 = vsel %vm1767, %v1748, %v1278
        %v1782 = vsel %vm1767, %v1749, %v1280
        %v1783 = vsel %vm1767, %v1750, %v1282
        %v1784 = vsel %vm1767, %v1751, %v1284
        %v1785 = vsel %vm1767, %v1752, %v1286
        %v1786 = vsel %vm1767, %v1753, %v1288
        %v1787 = vsel %vm1767, %v1754, %v1290
        %v1788 = vsel %vm1767, %v1755, %v1292
        %v1789 = vsel %vm1767, %v1756, %v1294
        %v1790 = vsel %vm1767, %v1757, %v1296
        %v1791 = vsel %vm1767, %v1758, %v1298
        %v1792 = vsel %vm1767, %v1759, %v1300
        %v1793 = vsel %vm1767, %v1760, %v1302
        %v1794 = vsel %vm1767, %v1761, %v1304
        %v1795 = vsel %vm1767, %v1762, %v1306
        %v1796 = vsel %vm1767, %v1763, %v1308
        %v1797 = vsel %vm1767, %v1764, %v1310
        %v1798 = vsel %vm1767, %v1765, %v1312
        %v1799 = vsel %vm1767, %v1766, %v1314
        %vm1800 = vcmask 228352
        %v1801 = vsel %vm1800, %v1768, %v1380
        %v1802 = vsel %vm1800, %v1769, %v1382
        %v1803 = vsel %vm1800, %v1770, %v1384
        %v1804 = vsel %vm1800, %v1771, %v1386
        %v1805 = vsel %vm1800, %v1772, %v1388
        %v1806 = vsel %vm1800, %v1773, %v1390
        %v1807 = vsel %vm1800, %v1774, %v1392
        %v1808 = vsel %vm1800, %v1775, %v1394
        %v1809 = vsel %vm1800, %v1776, %v1396
        %v1810 = vsel %vm1800, %v1777, %v1398
        %v1811 = vsel %vm1800, %v1778, %v1400
        %v1812 = vsel %vm1800, %v1779, %v1402
        %v1813 = vsel %vm1800, %v1780, %v1404
        %v1814 = vsel %vm1800, %v1781, %v1406
        %v1815 = vsel %vm1800, %v1782, %v1408
        %v1816 = vsel %vm1800, %v1783, %v1410
        %v1817 = vsel %vm1800, %v1784, %v1412
        %v1818 = vsel %vm1800, %v1785, %v1414
        %v1819 = vsel %vm1800, %v1786, %v1416
        %v1820 = vsel %vm1800, %v1787, %v1418
        %v1821 = vsel %vm1800, %v1788, %v1420
        %v1822 = vsel %vm1800, %v1789, %v1422
        %v1823 = vsel %vm1800, %v1790, %v1424
        %v1824 = vsel %vm1800, %v1791, %v1426
        %v1825 = vsel %vm1800, %v1792, %v1428
        %v1826 = vsel %vm1800, %v1793, %v1430
        %v1827 = vsel %vm1800, %v1794, %v1432
        %v1828 = vsel %vm1800, %v1795, %v1434
        %v1829 = vsel %vm1800, %v1796, %v1436
        %v1830 = vsel %vm1800, %v1797, %v1438
        %v1831 = vsel %vm1800, %v1798, %v1440
        %v1832 = vsel %vm1800, %v1799, %v1442
        %vm1833 = vcmask 261120
        %v1834 = vsel %vm1833, %v1801, %v1508
        %v1835 = vsel %vm1833, %v1802, %v1510
        %v1836 = vsel %vm1833, %v1803, %v1512
        %v1837 = vsel %vm1833, %v1804, %v1514
        %v1838 = vsel %vm1833, %v1805, %v1516
        %v1839 = vsel %vm1833, %v1806, %v1518
        %v1840 = vsel %vm1833, %v1807, %v1520
        %v1841 = vsel %vm1833, %v1808, %v1522
        %v1842 = vsel %vm1833, %v1809, %v1524
        %v1843 = vsel %vm1833, %v1810, %v1526
        %v1844 = vsel %vm1833, %v1811, %v1528
        %v1845 = vsel %vm1833, %v1812, %v1530
        %v1846 = vsel %vm1833, %v1813, %v1532
        %v1847 = vsel %vm1833, %v1814, %v1534
        %v1848 = vsel %vm1833, %v1815, %v1536
        %v1849 = vsel %vm1833, %v1816, %v1538
        %v1850 = vsel %vm1833, %v1817, %v1540
        %v1851 = vsel %vm1833, %v1818, %v1542
        %v1852 = vsel %vm1833, %v1819, %v1544
        %v1853 = vsel %vm1833, %v1820, %v1546
        %v1854 = vsel %vm1833, %v1821, %v1548
        %v1855 = vsel %vm1833, %v1822, %v1550
        %v1856 = vsel %vm1833, %v1823, %v1552
        %v1857 = vsel %vm1833, %v1824, %v1554
        %v1858 = vsel %vm1833, %v1825, %v1556
        %v1859 = vsel %vm1833, %v1826, %v1558
        %v1860 = vsel %vm1833, %v1827, %v1560
        %v1861 = vsel %vm1833, %v1828, %v1562
        %v1862 = vsel %vm1833, %v1829, %v1564
        %v1863 = vsel %vm1833, %v1830, %v1566
        %v1864 = vsel %vm1833, %v1831, %v1568
        %v1865 = vsel %vm1833, %v1832, %v1570
        %v1866 = vld [vmem:[%s1] sm:$0xff]
        %v1867 = vld [vmem:[%s1 + $0x8] sm:$0xff]
        %v1868 = vld [vmem:[%s1 + $0x10] sm:$0xff]
        %v1869 = vld [vmem:[%s1 + $0x18] sm:$0xff]
        %v1870 = vld [vmem:[%s1 + $0x20] sm:$0xf]
        %vm1871 = vcmask 293888
        %v1873 = vsel %vm1871, %v1834, 0
        %v1876 = vsel %vm1871, %v1835, 0
        %v1879 = vsel %vm1871, %v1836, 0
        %v1882 = vsel %vm1871, %v1837, 0
        %v1885 = vsel %vm1871, %v1838, 0
        %v1888 = vsel %vm1871, %v1839, 0
        %v1891 = vsel %vm1871, %v1840, 0
        %v1894 = vsel %vm1871, %v1841, 0
        %v1897 = vsel %vm1871, %v1842, 0
        %v1900 = vsel %vm1871, %v1843, 0
        %v1903 = vsel %vm1871, %v1844, 0
        %v1906 = vsel %vm1871, %v1845, 0
        %v1909 = vsel %vm1871, %v1846, 0
        %v1912 = vsel %vm1871, %v1847, 0
        %v1915 = vsel %vm1871, %v1848, 0
        %v1918 = vsel %vm1871, %v1849, 0
        %v1921 = vsel %vm1871, %v1850, 0
        %v1924 = vsel %vm1871, %v1851, 0
        %v1927 = vsel %vm1871, %v1852, 0
        %v1930 = vsel %vm1871, %v1853, 0
        %v1933 = vsel %vm1871, %v1854, 0
        %v1936 = vsel %vm1871, %v1855, 0
        %v1939 = vsel %vm1871, %v1856, 0
        %v1942 = vsel %vm1871, %v1857, 0
        %v1945 = vsel %vm1871, %v1858, 0
        %v1948 = vsel %vm1871, %v1859, 0
        %v1951 = vsel %vm1871, %v1860, 0
        %v1954 = vsel %vm1871, %v1861, 0
        %v1957 = vsel %vm1871, %v1862, 0
        %v1960 = vsel %vm1871, %v1863, 0
        %v1963 = vsel %vm1871, %v1864, 0
        %v1966 = vsel %vm1871, %v1865, 0
        %vm1968 = vcmask 1043456
        %v1970 = vsel %vm1968, %v1870, 0
        %1972 = vmatprep.subr.mxu0 0.0
        %1973 = vmatpush1.msra.mxu0 0.0
        %1974 = vmatprep.subr.mxu0 0.0
        %1975 = vmatpush1.msra.mxu0 0.0
        %1976 = vmatprep.subr.mxu0 0.0
        %1977 = vmatpush1.msra.mxu0 0.0
        %1978 = vmatprep.subr.mxu0 0.0
        %1979 = vmatpush1.msra.mxu0 0.0
        %1980 = vmatprep.subr.mxu0 0.0
        %1981 = vmatpush1.msra.mxu0 0.0
        %1982 = vmatprep.subr.mxu0 0.0
        %1983 = vmatpush1.msra.mxu0 0.0
        %1984 = vmatprep.subr.mxu0 0.0
        %1985 = vmatpush1.msra.mxu0 0.0
        %1986 = vmatprep.subr.mxu0 0.0
        %1987 = vmatpush1.msra.mxu0 0.0
        %1988 = vmatprep.subr.mxu0 0.0
        %1989 = vmatpush1.msra.mxu0 0.0
        %1990 = vmatprep.subr.mxu0 0.0
        %1991 = vmatpush1.msra.mxu0 0.0
        %1992 = vmatprep.subr.mxu0 0.0
        %1993 = vmatpush1.msra.mxu0 0.0
        %1994 = vmatprep.subr.mxu0 0.0
        %1995 = vmatpush1.msra.mxu0 %v1970
        %1996 = vmatprep.subr.mxu0 0.0
        %1997 = vmatpush1.msra.mxu0 %v1869
        %1998 = vmatprep.subr.mxu0 0.0
        %1999 = vmatpush1.msra.mxu0 %v1868
        %2000 = vmatprep.subr.mxu0 0.0
        %2001 = vmatpush1.msra.mxu0 %v1867
        %2002 = vmatprep.subr.mxu0 0.0
        %2003 = vmatpush1.msra.mxu0 %v1866
        %2004 = vmatprep.subr.mxu0 0.0
        %2005 = vmatpush2.msra.mxu0 0.0
        %2006 = vmatprep.subr.mxu0 0.0
        %2007 = vmatpush2.msra.mxu0 0.0
        %2008 = vmatprep.subr.mxu0 0.0
        %2009 = vmatpush2.msra.mxu0 0.0
        %2010 = vmatprep.subr.mxu0 0.0
        %2011 = vmatpush2.msra.mxu0 0.0
        %2012 = vmatprep.subr.mxu0 0.0
        %2013 = vmatpush2.msra.mxu0 0.0
        %2014 = vmatprep.subr.mxu0 0.0
        %2015 = vmatpush2.msra.mxu0 0.0
        %2016 = vmatprep.subr.mxu0 0.0
        %2017 = vmatpush2.msra.mxu0 0.0
        %2018 = vmatprep.subr.mxu0 0.0
        %2019 = vmatpush2.msra.mxu0 0.0
        %2020 = vmatprep.subr.mxu0 0.0
        %2021 = vmatpush2.msra.mxu0 0.0
        %2022 = vmatprep.subr.mxu0 0.0
        %2023 = vmatpush2.msra.mxu0 0.0
        %2024 = vmatprep.subr.mxu0 0.0
        %2025 = vmatpush2.msra.mxu0 0.0
        %2026 = vmatprep.subr.mxu0 0.0
        %2027 = vmatpush2.msra.mxu0 0.0
        %2028 = vmatprep.subr.mxu0 0.0
        %2029 = vmatpush2.msra.mxu0 0.0
        %2030 = vmatprep.subr.mxu0 0.0
        %2031 = vmatpush2.msra.mxu0 0.0
        %2032 = vmatprep.subr.mxu0 0.0
        %2033 = vmatpush2.msra.mxu0 0.0
        %2034 = vmatprep.subr.mxu0 0.0
        %2035 = vmatpush2.msra.mxu0 0.0
        %2036 = vmatprep.mubr.f32.mxu0 0.0
        %2037 = vmatmul.mubr.f32.gmra.mxu0 %v1873
        %v2038 = vpop.f32.mrf.mxu0
        %v2039 = vadd.f32 0.0, %v2038
        %v2040 = vpop.f32.mrf.mxu0
        %2041 = vmatprep.mubr.f32.mxu0 0.0
        %2042 = vmatmul.mubr.f32.gmra.mxu0 %v1876
        %v2043 = vpop.f32.mrf.mxu0
        %v2044 = vadd.f32 0.0, %v2043
        %v2045 = vpop.f32.mrf.mxu0
        %2046 = vmatprep.mubr.f32.mxu0 0.0
        %2047 = vmatmul.mubr.f32.gmra.mxu0 %v1879
        %v2048 = vpop.f32.mrf.mxu0
        %v2049 = vadd.f32 0.0, %v2048
        %v2050 = vpop.f32.mrf.mxu0
        %2051 = vmatprep.mubr.f32.mxu0 0.0
        %2052 = vmatmul.mubr.f32.gmra.mxu0 %v1882
        %v2053 = vpop.f32.mrf.mxu0
        %v2054 = vadd.f32 0.0, %v2053
        %v2055 = vpop.f32.mrf.mxu0
        %2056 = vmatprep.mubr.f32.mxu0 0.0
        %2057 = vmatmul.mubr.f32.gmra.mxu0 %v1885
        %v2058 = vpop.f32.mrf.mxu0
        %v2059 = vadd.f32 0.0, %v2058
        %v2060 = vpop.f32.mrf.mxu0
        %2061 = vmatprep.mubr.f32.mxu0 0.0
        %2062 = vmatmul.mubr.f32.gmra.mxu0 %v1888
        %v2063 = vpop.f32.mrf.mxu0
        %v2064 = vadd.f32 0.0, %v2063
        %v2065 = vpop.f32.mrf.mxu0
        %2066 = vmatprep.mubr.f32.mxu0 0.0
        %2067 = vmatmul.mubr.f32.gmra.mxu0 %v1891
        %v2068 = vpop.f32.mrf.mxu0
        %v2069 = vadd.f32 0.0, %v2068
        %v2070 = vpop.f32.mrf.mxu0
        %2071 = vmatprep.mubr.f32.mxu0 0.0
        %2072 = vmatmul.mubr.f32.gmra.mxu0 %v1894
        %v2073 = vpop.f32.mrf.mxu0
        %v2074 = vadd.f32 0.0, %v2073
        %v2075 = vpop.f32.mrf.mxu0
        %2076 = vmatprep.mubr.f32.mxu0 0.0
        %2077 = vmatmul.mubr.f32.gmra.mxu0 %v1897
        %v2078 = vpop.f32.mrf.mxu0
        %v2079 = vadd.f32 0.0, %v2078
        %v2080 = vpop.f32.mrf.mxu0
        %2081 = vmatprep.mubr.f32.mxu0 0.0
        %2082 = vmatmul.mubr.f32.gmra.mxu0 %v1900
        %v2083 = vpop.f32.mrf.mxu0
        %v2084 = vadd.f32 0.0, %v2083
        %v2085 = vpop.f32.mrf.mxu0
        %2086 = vmatprep.mubr.f32.mxu0 0.0
        %2087 = vmatmul.mubr.f32.gmra.mxu0 %v1903
        %v2088 = vpop.f32.mrf.mxu0
        %v2089 = vadd.f32 0.0, %v2088
        %v2090 = vpop.f32.mrf.mxu0
        %2091 = vmatprep.mubr.f32.mxu0 0.0
        %2092 = vmatmul.mubr.f32.gmra.mxu0 %v1906
        %v2093 = vpop.f32.mrf.mxu0
        %v2094 = vadd.f32 0.0, %v2093
        %v2095 = vpop.f32.mrf.mxu0
        %2096 = vmatprep.mubr.f32.mxu0 0.0
        %2097 = vmatmul.mubr.f32.gmra.mxu0 %v1909
        %v2098 = vpop.f32.mrf.mxu0
        %v2099 = vadd.f32 0.0, %v2098
        %v2100 = vpop.f32.mrf.mxu0
        %2101 = vmatprep.mubr.f32.mxu0 0.0
        %2102 = vmatmul.mubr.f32.gmra.mxu0 %v1912
        %v2103 = vpop.f32.mrf.mxu0
        %v2104 = vadd.f32 0.0, %v2103
        %v2105 = vpop.f32.mrf.mxu0
        %2106 = vmatprep.mubr.f32.mxu0 0.0
        %2107 = vmatmul.mubr.f32.gmra.mxu0 %v1915
        %v2108 = vpop.f32.mrf.mxu0
        %v2109 = vadd.f32 0.0, %v2108
        %v2110 = vpop.f32.mrf.mxu0
        %2111 = vmatprep.mubr.f32.mxu0 0.0
        %2112 = vmatmul.mubr.f32.gmra.mxu0 %v1918
        %v2113 = vpop.f32.mrf.mxu0
        %v2114 = vadd.f32 0.0, %v2113
        %v2115 = vpop.f32.mrf.mxu0
        %2116 = vmatprep.mubr.f32.mxu0 0.0
        %2117 = vmatmul.mubr.f32.gmra.mxu0 %v1921
        %v2118 = vpop.f32.mrf.mxu0
        %v2119 = vadd.f32 0.0, %v2118
        %v2120 = vpop.f32.mrf.mxu0
        %2121 = vmatprep.mubr.f32.mxu0 0.0
        %2122 = vmatmul.mubr.f32.gmra.mxu0 %v1924
        %v2123 = vpop.f32.mrf.mxu0
        %v2124 = vadd.f32 0.0, %v2123
        %v2125 = vpop.f32.mrf.mxu0
        %2126 = vmatprep.mubr.f32.mxu0 0.0
        %2127 = vmatmul.mubr.f32.gmra.mxu0 %v1927
        %v2128 = vpop.f32.mrf.mxu0
        %v2129 = vadd.f32 0.0, %v2128
        %v2130 = vpop.f32.mrf.mxu0
        %2131 = vmatprep.mubr.f32.mxu0 0.0
        %2132 = vmatmul.mubr.f32.gmra.mxu0 %v1930
        %v2133 = vpop.f32.mrf.mxu0
        %v2134 = vadd.f32 0.0, %v2133
        %v2135 = vpop.f32.mrf.mxu0
        %2136 = vmatprep.mubr.f32.mxu0 0.0
        %2137 = vmatmul.mubr.f32.gmra.mxu0 %v1933
        %v2138 = vpop.f32.mrf.mxu0
        %v2139 = vadd.f32 0.0, %v2138
        %v2140 = vpop.f32.mrf.mxu0
        %2141 = vmatprep.mubr.f32.mxu0 0.0
        %2142 = vmatmul.mubr.f32.gmra.mxu0 %v1936
        %v2143 = vpop.f32.mrf.mxu0
        %v2144 = vadd.f32 0.0, %v2143
        %v2145 = vpop.f32.mrf.mxu0
        %2146 = vmatprep.mubr.f32.mxu0 0.0
        %2147 = vmatmul.mubr.f32.gmra.mxu0 %v1939
        %v2148 = vpop.f32.mrf.mxu0
        %v2149 = vadd.f32 0.0, %v2148
        %v2150 = vpop.f32.mrf.mxu0
        %2151 = vmatprep.mubr.f32.mxu0 0.0
        %2152 = vmatmul.mubr.f32.gmra.mxu0 %v1942
        %v2153 = vpop.f32.mrf.mxu0
        %v2154 = vadd.f32 0.0, %v2153
        %v2155 = vpop.f32.mrf.mxu0
        %2156 = vmatprep.mubr.f32.mxu0 0.0
        %2157 = vmatmul.mubr.f32.gmra.mxu0 %v1945
        %v2158 = vpop.f32.mrf.mxu0
        %v2159 = vadd.f32 0.0, %v2158
        %v2160 = vpop.f32.mrf.mxu0
        %2161 = vmatprep.mubr.f32.mxu0 0.0
        %2162 = vmatmul.mubr.f32.gmra.mxu0 %v1948
        %v2163 = vpop.f32.mrf.mxu0
        %v2164 = vadd.f32 0.0, %v2163
        %v2165 = vpop.f32.mrf.mxu0
        %2166 = vmatprep.mubr.f32.mxu0 0.0
        %2167 = vmatmul.mubr.f32.gmra.mxu0 %v1951
        %v2168 = vpop.f32.mrf.mxu0
        %v2169 = vadd.f32 0.0, %v2168
        %v2170 = vpop.f32.mrf.mxu0
        %2171 = vmatprep.mubr.f32.mxu0 0.0
        %2172 = vmatmul.mubr.f32.gmra.mxu0 %v1954
        %v2173 = vpop.f32.mrf.mxu0
        %v2174 = vadd.f32 0.0, %v2173
        %v2175 = vpop.f32.mrf.mxu0
        %2176 = vmatprep.mubr.f32.mxu0 0.0
        %2177 = vmatmul.mubr.f32.gmra.mxu0 %v1957
        %v2178 = vpop.f32.mrf.mxu0
        %v2179 = vadd.f32 0.0, %v2178
        %v2180 = vpop.f32.mrf.mxu0
        %2181 = vmatprep.mubr.f32.mxu0 0.0
        %2182 = vmatmul.mubr.f32.gmra.mxu0 %v1960
        %v2183 = vpop.f32.mrf.mxu0
        %v2184 = vadd.f32 0.0, %v2183
        %v2185 = vpop.f32.mrf.mxu0
        %2186 = vmatprep.mubr.f32.mxu0 0.0
        %2187 = vmatmul.mubr.f32.gmra.mxu0 %v1963
        %v2188 = vpop.f32.mrf.mxu0
        %v2189 = vadd.f32 0.0, %v2188
        %v2190 = vpop.f32.mrf.mxu0
        %2191 = vmatprep.mubr.f32.mxu0 0.0
        %2192 = vmatmul.mubr.f32.gmra.mxu0 %v1966
        %v2193 = vpop.f32.mrf.mxu0
        %v2194 = vadd.f32 0.0, %v2193
        %v2195 = vpop.f32.mrf.mxu0
        %2196 = vdwg.mxu0
        %v2197 = vld [vmem:[%s2] sm:$0xff]
        %v2198 = vld [vmem:[%s2 + $0x8] sm:$0xff]
        %2199 = vxpose.xlu0.b32.start [1/16] %v2039, 128
        %2200 = vxpose.xlu0.b32.cont [2/16] %v2044, 128
        %2201 = vxpose.xlu0.b32.cont [3/16] %v2049, 128
        %2202 = vxpose.xlu0.b32.cont [4/16] %v2054, 128
        %2203 = vxpose.xlu0.b32.cont [5/16] %v2059, 128
        %2204 = vxpose.xlu0.b32.cont [6/16] %v2064, 128
        %2205 = vxpose.xlu0.b32.cont [7/16] %v2069, 128
        %2206 = vxpose.xlu0.b32.cont [8/16] %v2074, 128
        %2207 = vxpose.xlu0.b32.cont [9/16] %v2079, 128
        %2208 = vxpose.xlu0.b32.cont [10/16] %v2084, 128
        %2209 = vxpose.xlu0.b32.cont [11/16] %v2089, 128
        %2210 = vxpose.xlu0.b32.cont [12/16] %v2094, 128
        %2211 = vxpose.xlu0.b32.cont [13/16] %v2099, 128
        %2212 = vxpose.xlu0.b32.cont [14/16] %v2104, 128
        %2213 = vxpose.xlu0.b32.cont [15/16] %v2109, 128
        %2214 = vxpose.xlu0.b32.end [16/16] %v2114, 128
        %v2215 = vpop.trf.xlu0
        %v2216 = vpop.trf.xlu0
        %v2217 = vpop.trf.xlu0
        %v2218 = vpop.trf.xlu0
        %v2219 = vpop.trf.xlu0
        %v2220 = vpop.trf.xlu0
        %v2221 = vpop.trf.xlu0
        %v2222 = vpop.trf.xlu0
        %v2223 = vpop.trf.xlu0
        %v2224 = vpop.trf.xlu0
        %v2225 = vpop.trf.xlu0
        %v2226 = vpop.trf.xlu0
        %v2227 = vpop.trf.xlu0
        %v2228 = vpop.trf.xlu0
        %v2229 = vpop.trf.xlu0
        %v2230 = vpop.trf.xlu0
        %2231 = vxpose.xlu0.b32.start [1/16] %v2119, 128
        %2232 = vxpose.xlu0.b32.cont [2/16] %v2124, 128
        %2233 = vxpose.xlu0.b32.cont [3/16] %v2129, 128
        %2234 = vxpose.xlu0.b32.cont [4/16] %v2134, 128
        %2235 = vxpose.xlu0.b32.cont [5/16] %v2139, 128
        %2236 = vxpose.xlu0.b32.cont [6/16] %v2144, 128
        %2237 = vxpose.xlu0.b32.cont [7/16] %v2149, 128
        %2238 = vxpose.xlu0.b32.cont [8/16] %v2154, 128
        %2239 = vxpose.xlu0.b32.cont [9/16] %v2159, 128
        %2240 = vxpose.xlu0.b32.cont [10/16] %v2164, 128
        %2241 = vxpose.xlu0.b32.cont [11/16] %v2169, 128
        %2242 = vxpose.xlu0.b32.cont [12/16] %v2174, 128
        %2243 = vxpose.xlu0.b32.cont [13/16] %v2179, 128
        %2244 = vxpose.xlu0.b32.cont [14/16] %v2184, 128
        %2245 = vxpose.xlu0.b32.cont [15/16] %v2189, 128
        %2246 = vxpose.xlu0.b32.end [16/16] %v2194, 128
        %v2247 = vpop.trf.xlu0
        %v2248 = vpop.trf.xlu0
        %v2249 = vpop.trf.xlu0
        %v2250 = vpop.trf.xlu0
        %v2251 = vpop.trf.xlu0
        %v2252 = vpop.trf.xlu0
        %v2253 = vpop.trf.xlu0
        %v2254 = vpop.trf.xlu0
        %v2255 = vpop.trf.xlu0
        %v2256 = vpop.trf.xlu0
        %v2257 = vpop.trf.xlu0
        %v2258 = vpop.trf.xlu0
        %v2259 = vpop.trf.xlu0
        %v2260 = vpop.trf.xlu0
        %v2261 = vpop.trf.xlu0
        %v2262 = vpop.trf.xlu0
        %v2263 = vadd.f32 %v2197, %v2215
        %v2264 = vadd.f32 %v2198, %v2247
        %2265 = vst [vmem:[%s163] sm:$0xff] %v2263
        %2266 = vst [vmem:[%s163 + $0x8] sm:$0xff] %v2264
        %s2267 = sand.u32 %s93, 1
        %s2268 = scalar_lea.sflag [#allocation4], %s2267
        %s2269 = sand.u32 %s93, 1
        %s2270 = smul.addr %s2269, 16
        %s2271 = scalar_lea.vmem [#allocation3], %s2270
        // Predicated region
        $region33: #{tpu_custom_call.1} parent=31 // pred_check
          %p2272 = pneg %p103
        $region34: #{tpu_custom_call.1} parent=31 // pred_check_branch
          %2274 = sbr.rel (%p2272) target = $region36
        $region35: #{tpu_custom_call.1} parent=31 // pred_region
          %s2276 = ssub.s32 256, 256
          %2277 = vsyncadd %s2268, %s2276
          %s2278 = smul.addr %s17, 2
          %s2279 = smul.addr %s2278, 128
          %s2280 = scalar_lea.hbm %s3, %s2279
          %s2282 = sshll.u32 %s2271, 4
          %s2283 = int_to_ptr.vmem [resolvable:$true] %s2282
          %2285 = dma.vmem_to_hbm [thread:$0]  %s2283, 256, %s2280, %s2268
        $region36: #{tpu_custom_call.1} parent=31 // pred_fallthru
          _
      $region32: #{tpu_custom_call.1} parent=5 // pred_fallthru
        _
      %p2286 = scmp.le.s32.totalorder 2, %s12
      // Predicated region
      $region37: #{tpu_custom_call.1} parent=5 // pred_check
        %p2287 = pneg %p2286
      $region38: #{tpu_custom_call.1} parent=5 // pred_check_branch
        %2289 = sbr.rel (%p2287) target = $region40
      $region39: #{tpu_custom_call.1} parent=5 // pred_region
        %s2290 = ssub.s32 %s12, 2
        // Predicated region
        $region41: #{tpu_custom_call.1} parent=39 // pred_check
          %p2291 = pneg %p109
        $region42: #{tpu_custom_call.1} parent=39 // pred_check_branch
          %2293 = sbr.rel (%p2291) target = $region44
        $region43: #{tpu_custom_call.1} parent=39 // pred_region
          %s2294 = sand.u32 %s94, 1
          %s2295 = scalar_lea.sflag [#allocation4], %s2294
          %s2296 = sand.u32 %s94, 1
          %s2297 = smul.addr %s2296, 16
          %s2298 = scalar_lea.vmem [#allocation3], %s2297
          %2299 = dma.done %s2295, 256
        $region44: #{tpu_custom_call.1} parent=39 // pred_fallthru
          _
      $region40: #{tpu_custom_call.1} parent=5 // pred_fallthru
        _
    $region6: #{tpu_custom_call.1} parent=1 // loop_footer
      %s16 = sadd.s32 1, %s12
    $region7: #{tpu_custom_call.1} parent=1 // loop_footer_branch
      %11 = sbr.rel target = $region3
    $region8: #{tpu_custom_call.1} parent=1 // loop_exit
      _
    %2300 = vsyncpa [#allocation4], 1
    %s2301 = scalar_lea.sflag [#allocation4], 1
    %2302 = vsyncpa %s2301, 1

</llo_original>
